<compile_context>
chip_gen: v6e
topology: v6e:2x2x1
jax: 0.10.0
libtpu: 0.0.40
codegen_flags: <defaults>
</compile_context>

<pallas_src>
import functools
import math

import jax
import jax.numpy as jnp
from jax.experimental import pallas as pl
from jax.experimental.pallas import tpu as pltpu

K_SIZE = 3    # global `K` in the PyTorch snippet (kernel size)
L_LAYERS = 2  # global `L` in the PyTorch snippet (number of hidden CCL layers)


# ------------------------------ fused kernel -------------------------------
def phi1_kernel(x_ref, perm_ref, m1_ref, b1_ref, mh_ref, bh_ref, o_ref, *,
                kh, n_hidden, relu):
    """All PHI_1 layers in one kernel invocation.

    x_ref   : (B*H, W*C0)          input activations, lane-dense
    perm_ref: (Kh, B*H, B*H)       0/1 per-batch circular H-shift matrices
    m1_ref  : (Kh, W*C0, W*C1)     layer-1 block-circulant weights
    b1_ref  : (1, W*C1)            layer-1 bias tiled over W
    mh_ref  : (L*Kh, W*C1, W*C1)   hidden-layer block-circulant weights
    bh_ref  : (L, 1, W*C1)         hidden-layer biases tiled over W
    o_ref   : (B*H, W*C1)          output, lane-dense (32 x 128)
    """
    rows, wc_out = o_ref.shape

    def ccl(act, get_m, b_row):
        # bias-initialized f32 accumulator (bias add fused into init)
        acc = jnp.broadcast_to(b_row, (rows, wc_out)).astype(jnp.float32)
        for p in range(kh):                      # static unroll, Kh = 3
            # circular shift of the H axis by p (per batch) via exact perm matmul
            shifted = act if p == 0 else jnp.dot(
                perm_ref[p], act, preferred_element_type=jnp.float32)
            acc = acc + jnp.dot(shifted, get_m(p),
                                preferred_element_type=jnp.float32)
        return jnp.maximum(acc, 0.0) if relu else acc

    act = ccl(x_ref[...], lambda p: m1_ref[p], b1_ref[...])
    for l in range(n_hidden):                    # static unroll, L = 2
        act = ccl(act, lambda p, l=l: mh_ref[l * kh + p], bh_ref[l])
    o_ref[...] = act


# --------------------------- host-side weight prep -------------------------
def _circulant_weight(weight, width):
    """(Cout,Cin,Kh,Kw) -> (Kh, W*Cin, W*Cout) block-circulant mats over W.

    M[p, w_in*Cin+ci, w_out*Cout+co] = w[co, ci, p, (w_out - w_in) % W]
    (zero when (w_out - w_in) % W >= Kw), so `x_row @ M[p]` performs both the
    circular W-shift and the Cin contraction for tap p.
    """
    c_out, c_in, kh, kw = weight.shape
    wpad = jnp.zeros((c_out, c_in, kh, width), weight.dtype)
    wpad = wpad.at[:, :, :, :kw].set(weight)
    idx = (jnp.arange(width)[None, :] - jnp.arange(width)[:, None]) % width
    m = wpad[:, :, :, idx]                       # (Cout,Cin,Kh,Win,Wout)
    m = jnp.transpose(m, (2, 3, 1, 4, 0))        # (Kh,Win,Cin,Wout,Cout)
    return m.reshape(kh, width * c_in, width * c_out)


def _bias_row(bias, width):
    """(Cout,) -> (1, W*Cout) with bias[co] at column w*Cout + co."""
    return jnp.tile(bias, width).reshape(1, width * bias.shape[0])


def _shift_perms(batch, height, kh):
    """(Kh, B*H, B*H): P[p] @ x circularly shifts the H axis by p per batch."""
    rows = jnp.arange(height)
    eye_b = jnp.eye(batch, dtype=jnp.float32)
    mats = []
    for p in range(kh):
        s = ((rows[:, None] - p) % height == rows[None, :]).astype(jnp.float32)
        mats.append(jnp.kron(eye_b, s))
    return jnp.stack(mats)


# ------------------------------- forward -----------------------------------
@functools.partial(jax.jit, static_argnames=("relu",))
def phi1_forward(x_nchw, params, relu=True):
    (w1, b1), hidden = params
    batch, c0, height, width = x_nchw.shape
    c1 = w1.shape[0]
    kh = w1.shape[2]
    n_hidden = len(hidden)
    rows = batch * height

    # one layout conversion in, one out (done outside the kernel, once)
    x2 = jnp.transpose(x_nchw, (0, 2, 3, 1)).reshape(rows, width * c0)

    perms = _shift_perms(batch, height, kh)
    m1 = _circulant_weight(w1, width)
    b1r = _bias_row(b1, width)
    mh = jnp.concatenate([_circulant_weight(w, width) for (w, _) in hidden],
                         axis=0)
    bhr = jnp.stack([_bias_row(b, width) for (_, b) in hidden], axis=0)

    kern = functools.partial(phi1_kernel, kh=kh, n_hidden=n_hidden, relu=relu)
    out2 = pl.pallas_call(
        kern,
        out_shape=jax.ShapeDtypeStruct((rows, width * c1), jnp.float32),
        in_specs=[pl.BlockSpec(memory_space=pltpu.MemorySpace.VMEM)] * 6,
        out_specs=pl.BlockSpec(memory_space=pltpu.MemorySpace.VMEM),
    )(x2, perms, m1, b1r, mh, bhr)
    # NOTE: the whole working set is <1 MB, so a single gridless call on one
    # TensorCore is optimal.  For much larger B/H/W, tile B*H with a grid and
    # dimension_semantics=("parallel",) to use both v7x TensorCores.
    return jnp.transpose(out2.reshape(batch, height, width, c1), (0, 3, 1, 2))


def init_ccl(key, c_in, c_out, k):
    """Matches torch init: U(-K, K) with K = sqrt(1 / (c_in * k * k))."""
    kw_key, kb_key = jax.random.split(key)
    bound = math.sqrt(1.0 / (c_in * k * k))
    w = jax.random.uniform(kw_key, (c_out, c_in, k, k), jnp.float32, -bound, bound)
    b = jax.random.uniform(kb_key, (c_out,), jnp.float32, -bound, bound)
    return w, b


# ---------- pure-JAX FFT reference (same math as the torch module) ----------
def ccl_ref(x, w, b, relu):
    dims = x.shape[-2:]
    xf = jnp.fft.rfft2(x)[:, None]            # (B,1,Cin,H,Wf)
    wf = jnp.fft.rfft2(w, s=dims)             # (Cout,Cin,H,Wf)
    hf = (xf * wf).sum(2)                     # (B,Cout,H,Wf)
    h = jnp.fft.irfft2(hf, s=dims) + b.reshape(-1, 1, 1)
    return jnp.maximum(h, 0.0) if relu else h


def phi1_ref(x, params, relu=True):
    (w1, b1), hidden = params
    x = ccl_ref(x, w1, b1, relu)
    for (w, b) in hidden:
        x = ccl_ref(x, w, b, relu)
    return x


if __name__ == "__main__":
    key = jax.random.PRNGKey(0)
    keys = jax.random.split(key, 2 + L_LAYERS)
    k_in, k1, k_hidden = keys[0], keys[1], keys[2:]

    B, Cin, H, W = 2, 10, 16, 16
    x = jax.random.normal(k_in, (B, Cin, H, W), jnp.float32)

    params_conv1 = init_ccl(k1, 10, 8, K_SIZE)
    params_hidden = [init_ccl(k, 8, 8, K_SIZE) for k in k_hidden]
    params = (params_conv1, params_hidden)

    out = jax.block_until_ready(phi1_forward(x, params, relu=True))
    assert out.shape == (B, 8, H, W), out.shape

    ref = jax.block_until_ready(phi1_ref(x, params, relu=True))
    max_err = float(jnp.max(jnp.abs(out - ref)))
    assert jnp.allclose(out, ref, atol=2e-3, rtol=2e-3), max_err

    print("KERNEL_OK")
</pallas_src>

<mosaic_0001>
module attributes {stable_mosaic.version = 11 : i64} {
  func.func @phi1_kernel(%arg0: memref<32x160xf32, #tpu.memory_space<vmem>>, %arg1: memref<3x32x32xf32, #tpu.memory_space<vmem>>, %arg2: memref<3x160x128xf32, #tpu.memory_space<vmem>>, %arg3: memref<1x128xf32, #tpu.memory_space<vmem>>, %arg4: memref<6x128x128xf32, #tpu.memory_space<vmem>>, %arg5: memref<2x1x128xf32, #tpu.memory_space<vmem>>, %arg6: memref<32x128xf32, #tpu.memory_space<vmem>>) attributes {dimension_semantics = [], scalar_prefetch = 0 : i64, scratch_operands = 0 : i64, tpu.core_type = #tpu.core_type<tc>} {
    %c0 = arith.constant 0 : index
    %c0_0 = arith.constant 0 : index
    %0 = vector.load %arg0[%c0, %c0_0] : memref<32x160xf32, #tpu.memory_space<vmem>>, vector<32x160xf32>
    %c0_1 = arith.constant 0 : index
    %c0_2 = arith.constant 0 : index
    %1 = vector.load %arg3[%c0_1, %c0_2] : memref<1x128xf32, #tpu.memory_space<vmem>>, vector<1x128xf32>
    %2 = vector.shape_cast %1 : vector<1x128xf32> to vector<1x128xf32>
    %3 = vector.broadcast %2 : vector<1x128xf32> to vector<32x128xf32>
    %c0_3 = arith.constant 0 : index
    %c0_4 = arith.constant 0 : index
    %c0_5 = arith.constant 0 : index
    %4 = vector.load %arg2[%c0_3, %c0_4, %c0_5] : memref<3x160x128xf32, #tpu.memory_space<vmem>>, vector<1x160x128xf32>
    %5 = vector.shape_cast %4 : vector<1x160x128xf32> to vector<160x128xf32>
    %cst = arith.constant dense<0.000000e+00> : vector<32x128xf32>
    %6 = tpu.matmul %0, %5, %cst {dimension_numbers = #tpu.dot_dimension_numbers<[1], [0], [0], [1], [0, 0, 1, 1], [], []>} : vector<32x160xf32>, vector<160x128xf32>, vector<32x128xf32> -> vector<32x128xf32>
    %7 = arith.addf %3, %6 : vector<32x128xf32>
    %c1 = arith.constant 1 : index
    %c0_6 = arith.constant 0 : index
    %c0_7 = arith.constant 0 : index
    %8 = vector.load %arg1[%c1, %c0_6, %c0_7] : memref<3x32x32xf32, #tpu.memory_space<vmem>>, vector<1x32x32xf32>
    %9 = vector.shape_cast %8 : vector<1x32x32xf32> to vector<32x32xf32>
    %cst_8 = arith.constant dense<0.000000e+00> : vector<32x160xf32>
    %10 = tpu.matmul %9, %0, %cst_8 {dimension_numbers = #tpu.dot_dimension_numbers<[1], [0], [0], [1], [0, 0, 1, 1], [], []>} : vector<32x32xf32>, vector<32x160xf32>, vector<32x160xf32> -> vector<32x160xf32>
    %c1_9 = arith.constant 1 : index
    %c0_10 = arith.constant 0 : index
    %c0_11 = arith.constant 0 : index
    %11 = vector.load %arg2[%c1_9, %c0_10, %c0_11] : memref<3x160x128xf32, #tpu.memory_space<vmem>>, vector<1x160x128xf32>
    %12 = vector.shape_cast %11 : vector<1x160x128xf32> to vector<160x128xf32>
    %cst_12 = arith.constant dense<0.000000e+00> : vector<32x128xf32>
    %13 = tpu.matmul %10, %12, %cst_12 {dimension_numbers = #tpu.dot_dimension_numbers<[1], [0], [0], [1], [0, 0, 1, 1], [], []>} : vector<32x160xf32>, vector<160x128xf32>, vector<32x128xf32> -> vector<32x128xf32>
    %14 = arith.addf %7, %13 : vector<32x128xf32>
    %c2 = arith.constant 2 : index
    %c0_13 = arith.constant 0 : index
    %c0_14 = arith.constant 0 : index
    %15 = vector.load %arg1[%c2, %c0_13, %c0_14] : memref<3x32x32xf32, #tpu.memory_space<vmem>>, vector<1x32x32xf32>
    %16 = vector.shape_cast %15 : vector<1x32x32xf32> to vector<32x32xf32>
    %cst_15 = arith.constant dense<0.000000e+00> : vector<32x160xf32>
    %17 = tpu.matmul %16, %0, %cst_15 {dimension_numbers = #tpu.dot_dimension_numbers<[1], [0], [0], [1], [0, 0, 1, 1], [], []>} : vector<32x32xf32>, vector<32x160xf32>, vector<32x160xf32> -> vector<32x160xf32>
    %c2_16 = arith.constant 2 : index
    %c0_17 = arith.constant 0 : index
    %c0_18 = arith.constant 0 : index
    %18 = vector.load %arg2[%c2_16, %c0_17, %c0_18] : memref<3x160x128xf32, #tpu.memory_space<vmem>>, vector<1x160x128xf32>
    %19 = vector.shape_cast %18 : vector<1x160x128xf32> to vector<160x128xf32>
    %cst_19 = arith.constant dense<0.000000e+00> : vector<32x128xf32>
    %20 = tpu.matmul %17, %19, %cst_19 {dimension_numbers = #tpu.dot_dimension_numbers<[1], [0], [0], [1], [0, 0, 1, 1], [], []>} : vector<32x160xf32>, vector<160x128xf32>, vector<32x128xf32> -> vector<32x128xf32>
    %21 = arith.addf %14, %20 : vector<32x128xf32>
    %cst_20 = arith.constant 0.000000e+00 : f32
    %22 = vector.broadcast %cst_20 : f32 to vector<32x128xf32>
    %23 = arith.maximumf %21, %22 : vector<32x128xf32>
    %c0_21 = arith.constant 0 : index
    %c0_22 = arith.constant 0 : index
    %c0_23 = arith.constant 0 : index
    %24 = vector.load %arg5[%c0_21, %c0_22, %c0_23] : memref<2x1x128xf32, #tpu.memory_space<vmem>>, vector<1x1x128xf32>
    %25 = vector.shape_cast %24 : vector<1x1x128xf32> to vector<1x128xf32>
    %26 = vector.shape_cast %25 : vector<1x128xf32> to vector<1x128xf32>
    %27 = vector.broadcast %26 : vector<1x128xf32> to vector<32x128xf32>
    %c0_24 = arith.constant 0 : index
    %c0_25 = arith.constant 0 : index
    %c0_26 = arith.constant 0 : index
    %28 = vector.load %arg4[%c0_24, %c0_25, %c0_26] : memref<6x128x128xf32, #tpu.memory_space<vmem>>, vector<1x128x128xf32>
    %29 = vector.shape_cast %28 : vector<1x128x128xf32> to vector<128x128xf32>
    %cst_27 = arith.constant dense<0.000000e+00> : vector<32x128xf32>
    %30 = tpu.matmul %23, %29, %cst_27 {dimension_numbers = #tpu.dot_dimension_numbers<[1], [0], [0], [1], [0, 0, 1, 1], [], []>} : vector<32x128xf32>, vector<128x128xf32>, vector<32x128xf32> -> vector<32x128xf32>
    %31 = arith.addf %27, %30 : vector<32x128xf32>
    %c1_28 = arith.constant 1 : index
    %c0_29 = arith.constant 0 : index
    %c0_30 = arith.constant 0 : index
    %32 = vector.load %arg1[%c1_28, %c0_29, %c0_30] : memref<3x32x32xf32, #tpu.memory_space<vmem>>, vector<1x32x32xf32>
    %33 = vector.shape_cast %32 : vector<1x32x32xf32> to vector<32x32xf32>
    %cst_31 = arith.constant dense<0.000000e+00> : vector<32x128xf32>
    %34 = tpu.matmul %33, %23, %cst_31 {dimension_numbers = #tpu.dot_dimension_numbers<[1], [0], [0], [1], [0, 0, 1, 1], [], []>} : vector<32x32xf32>, vector<32x128xf32>, vector<32x128xf32> -> vector<32x128xf32>
    %c1_32 = arith.constant 1 : index
    %c0_33 = arith.constant 0 : index
    %c0_34 = arith.constant 0 : index
    %35 = vector.load %arg4[%c1_32, %c0_33, %c0_34] : memref<6x128x128xf32, #tpu.memory_space<vmem>>, vector<1x128x128xf32>
    %36 = vector.shape_cast %35 : vector<1x128x128xf32> to vector<128x128xf32>
    %cst_35 = arith.constant dense<0.000000e+00> : vector<32x128xf32>
    %37 = tpu.matmul %34, %36, %cst_35 {dimension_numbers = #tpu.dot_dimension_numbers<[1], [0], [0], [1], [0, 0, 1, 1], [], []>} : vector<32x128xf32>, vector<128x128xf32>, vector<32x128xf32> -> vector<32x128xf32>
    %38 = arith.addf %31, %37 : vector<32x128xf32>
    %c2_36 = arith.constant 2 : index
    %c0_37 = arith.constant 0 : index
    %c0_38 = arith.constant 0 : index
    %39 = vector.load %arg1[%c2_36, %c0_37, %c0_38] : memref<3x32x32xf32, #tpu.memory_space<vmem>>, vector<1x32x32xf32>
    %40 = vector.shape_cast %39 : vector<1x32x32xf32> to vector<32x32xf32>
    %cst_39 = arith.constant dense<0.000000e+00> : vector<32x128xf32>
    %41 = tpu.matmul %40, %23, %cst_39 {dimension_numbers = #tpu.dot_dimension_numbers<[1], [0], [0], [1], [0, 0, 1, 1], [], []>} : vector<32x32xf32>, vector<32x128xf32>, vector<32x128xf32> -> vector<32x128xf32>
    %c2_40 = arith.constant 2 : index
    %c0_41 = arith.constant 0 : index
    %c0_42 = arith.constant 0 : index
    %42 = vector.load %arg4[%c2_40, %c0_41, %c0_42] : memref<6x128x128xf32, #tpu.memory_space<vmem>>, vector<1x128x128xf32>
    %43 = vector.shape_cast %42 : vector<1x128x128xf32> to vector<128x128xf32>
    %cst_43 = arith.constant dense<0.000000e+00> : vector<32x128xf32>
    %44 = tpu.matmul %41, %43, %cst_43 {dimension_numbers = #tpu.dot_dimension_numbers<[1], [0], [0], [1], [0, 0, 1, 1], [], []>} : vector<32x128xf32>, vector<128x128xf32>, vector<32x128xf32> -> vector<32x128xf32>
    %45 = arith.addf %38, %44 : vector<32x128xf32>
    %cst_44 = arith.constant 0.000000e+00 : f32
    %46 = vector.broadcast %cst_44 : f32 to vector<32x128xf32>
    %47 = arith.maximumf %45, %46 : vector<32x128xf32>
    %c1_45 = arith.constant 1 : index
    %c0_46 = arith.constant 0 : index
    %c0_47 = arith.constant 0 : index
    %48 = vector.load %arg5[%c1_45, %c0_46, %c0_47] : memref<2x1x128xf32, #tpu.memory_space<vmem>>, vector<1x1x128xf32>
    %49 = vector.shape_cast %48 : vector<1x1x128xf32> to vector<1x128xf32>
    %50 = vector.shape_cast %49 : vector<1x128xf32> to vector<1x128xf32>
    %51 = vector.broadcast %50 : vector<1x128xf32> to vector<32x128xf32>
    %c3 = arith.constant 3 : index
    %c0_48 = arith.constant 0 : index
    %c0_49 = arith.constant 0 : index
    %52 = vector.load %arg4[%c3, %c0_48, %c0_49] : memref<6x128x128xf32, #tpu.memory_space<vmem>>, vector<1x128x128xf32>
    %53 = vector.shape_cast %52 : vector<1x128x128xf32> to vector<128x128xf32>
    %cst_50 = arith.constant dense<0.000000e+00> : vector<32x128xf32>
    %54 = tpu.matmul %47, %53, %cst_50 {dimension_numbers = #tpu.dot_dimension_numbers<[1], [0], [0], [1], [0, 0, 1, 1], [], []>} : vector<32x128xf32>, vector<128x128xf32>, vector<32x128xf32> -> vector<32x128xf32>
    %55 = arith.addf %51, %54 : vector<32x128xf32>
    %c1_51 = arith.constant 1 : index
    %c0_52 = arith.constant 0 : index
    %c0_53 = arith.constant 0 : index
    %56 = vector.load %arg1[%c1_51, %c0_52, %c0_53] : memref<3x32x32xf32, #tpu.memory_space<vmem>>, vector<1x32x32xf32>
    %57 = vector.shape_cast %56 : vector<1x32x32xf32> to vector<32x32xf32>
    %cst_54 = arith.constant dense<0.000000e+00> : vector<32x128xf32>
    %58 = tpu.matmul %57, %47, %cst_54 {dimension_numbers = #tpu.dot_dimension_numbers<[1], [0], [0], [1], [0, 0, 1, 1], [], []>} : vector<32x32xf32>, vector<32x128xf32>, vector<32x128xf32> -> vector<32x128xf32>
    %c4 = arith.constant 4 : index
    %c0_55 = arith.constant 0 : index
    %c0_56 = arith.constant 0 : index
    %59 = vector.load %arg4[%c4, %c0_55, %c0_56] : memref<6x128x128xf32, #tpu.memory_space<vmem>>, vector<1x128x128xf32>
    %60 = vector.shape_cast %59 : vector<1x128x128xf32> to vector<128x128xf32>
    %cst_57 = arith.constant dense<0.000000e+00> : vector<32x128xf32>
    %61 = tpu.matmul %58, %60, %cst_57 {dimension_numbers = #tpu.dot_dimension_numbers<[1], [0], [0], [1], [0, 0, 1, 1], [], []>} : vector<32x128xf32>, vector<128x128xf32>, vector<32x128xf32> -> vector<32x128xf32>
    %62 = arith.addf %55, %61 : vector<32x128xf32>
    %c2_58 = arith.constant 2 : index
    %c0_59 = arith.constant 0 : index
    %c0_60 = arith.constant 0 : index
    %63 = vector.load %arg1[%c2_58, %c0_59, %c0_60] : memref<3x32x32xf32, #tpu.memory_space<vmem>>, vector<1x32x32xf32>
    %64 = vector.shape_cast %63 : vector<1x32x32xf32> to vector<32x32xf32>
    %cst_61 = arith.constant dense<0.000000e+00> : vector<32x128xf32>
    %65 = tpu.matmul %64, %47, %cst_61 {dimension_numbers = #tpu.dot_dimension_numbers<[1], [0], [0], [1], [0, 0, 1, 1], [], []>} : vector<32x32xf32>, vector<32x128xf32>, vector<32x128xf32> -> vector<32x128xf32>
    %c5 = arith.constant 5 : index
    %c0_62 = arith.constant 0 : index
    %c0_63 = arith.constant 0 : index
    %66 = vector.load %arg4[%c5, %c0_62, %c0_63] : memref<6x128x128xf32, #tpu.memory_space<vmem>>, vector<1x128x128xf32>
    %67 = vector.shape_cast %66 : vector<1x128x128xf32> to vector<128x128xf32>
    %cst_64 = arith.constant dense<0.000000e+00> : vector<32x128xf32>
    %68 = tpu.matmul %65, %67, %cst_64 {dimension_numbers = #tpu.dot_dimension_numbers<[1], [0], [0], [1], [0, 0, 1, 1], [], []>} : vector<32x128xf32>, vector<128x128xf32>, vector<32x128xf32> -> vector<32x128xf32>
    %69 = arith.addf %62, %68 : vector<32x128xf32>
    %cst_65 = arith.constant 0.000000e+00 : f32
    %70 = vector.broadcast %cst_65 : f32 to vector<32x128xf32>
    %71 = arith.maximumf %69, %70 : vector<32x128xf32>
    %c0_66 = arith.constant 0 : index
    %c0_67 = arith.constant 0 : index
    %72 = vector.load %arg6[%c0_66, %c0_67] : memref<32x128xf32, #tpu.memory_space<vmem>>, vector<32x128xf32>
    tpu.vector_store %arg6[%c0_66, %c0_67], %71 {strides = array<i32>} : memref<32x128xf32, #tpu.memory_space<vmem>>, vector<32x128xf32>,
    return
  }
}

</mosaic_0001>

<llo_original>
// kernel: tile.23
$region0: #{tile.23}
  #allocation0 [shape = 's32[1]{0}', space=sflag, size = 0x4, scoped, tag = 'scoped memory for tile.23']
  %s0 = inlined_call_operand.vmem [shape: f32[8], index: 0, kind: input, shape index: {}]
  %s1 = inlined_call_operand.vmem [shape: f32[16,8], index: 1, kind: output, shape index: {}]
  // Predicated region
  $region2: #{tile.23} parent=0 // pred_check
    _
  $region3: #{tile.23} parent=0 // pred_check_branch
    %3 = sbr.rel (0) target = $region5
  $region4: #{tile.23} parent=0 // pred_region
    _
  $region5: #{tile.23} parent=0 // pred_fallthru
    _
  %v4 = vld [vmem:[%s0] ss:$0 sm:$0xff]
  %5 = vst [vmem:[%s1] sm:$0xff] %v4
  %s6 = scalar_lea.vmem %s1, 8
  %7 = vst [vmem:[%s6] sm:$0xff] %v4

// kernel: tile.28
$region0: #{tile.28}
  %s0 = inlined_call_operand.vmem [shape: f32[16,8], index: 0, kind: input, shape index: {}]
  %s1 = inlined_call_operand.vmem [shape: f32[1,1,128], index: 1, kind: output, shape index: {}]
  $region1: #{tile.28} parent=0
    #allocation0 [shape = 'u8[4096]{0}', space=vmem, size = 0x1000, scoped, tag = 'scoped mem for output reshape']
    %v2 = vld [vmem:[%s0] sm:$0x1]
    %vm3 = vcmask 64512
    %4 = vst.msk [vmem:[#allocation0] sm:$0x1] %vm3, %v2
    %s5 = scalar_lea.vmem %s0, 15
    %v6 = vld [vmem:[%s5] sm:$0x1]
    %7 = vrot.lane.b32.xlu0 %v6, 120
    %v8 = vpop.permute.xlu0 %7
    %vm9 = vcmask 1048512
    %10 = vst.msk [vmem:[#allocation0] sm:$0x1] %vm9, %v8
    %s11 = scalar_lea.vmem %s0, 14
    %v12 = vld [vmem:[%s11] sm:$0x1]
    %13 = vrot.lane.b32.xlu0 %v12, 112
    %v14 = vpop.permute.xlu0 %13
    %vm15 = vcmask 982912
    %16 = vst.msk [vmem:[#allocation0] sm:$0x1] %vm15, %v14
    %s17 = scalar_lea.vmem %s0, 13
    %v18 = vld [vmem:[%s17] sm:$0x1]
    %19 = vrot.lane.b32.xlu0 %v18, 104
    %v20 = vpop.permute.xlu0 %19
    %vm21 = vcmask 917312
    %22 = vst.msk [vmem:[#allocation0] sm:$0x1] %vm21, %v20
    %s23 = scalar_lea.vmem %s0, 12
    %v24 = vld [vmem:[%s23] sm:$0x1]
    %25 = vrot.lane.b32.xlu0 %v24, 96
    %v26 = vpop.permute.xlu0 %25
    %vm27 = vcmask 851712
    %28 = vst.msk [vmem:[#allocation0] sm:$0x1] %vm27, %v26
    %s29 = scalar_lea.vmem %s0, 11
    %v30 = vld [vmem:[%s29] sm:$0x1]
    %31 = vrot.lane.b32.xlu0 %v30, 88
    %v32 = vpop.permute.xlu0 %31
    %vm33 = vcmask 786112
    %34 = vst.msk [vmem:[#allocation0] sm:$0x1] %vm33, %v32
    %s35 = scalar_lea.vmem %s0, 10
    %v36 = vld [vmem:[%s35] sm:$0x1]
    %37 = vrot.lane.b32.xlu0 %v36, 80
    %v38 = vpop.permute.xlu0 %37
    %vm39 = vcmask 720512
    %40 = vst.msk [vmem:[#allocation0] sm:$0x1] %vm39, %v38
    %s41 = scalar_lea.vmem %s0, 9
    %v42 = vld [vmem:[%s41] sm:$0x1]
    %43 = vrot.lane.b32.xlu0 %v42, 72
    %v44 = vpop.permute.xlu0 %43
    %vm45 = vcmask 654912
    %46 = vst.msk [vmem:[#allocation0] sm:$0x1] %vm45, %v44
    %s47 = scalar_lea.vmem %s0, 8
    %v48 = vld [vmem:[%s47] sm:$0x1]
    %49 = vrot.lane.b32.xlu0 %v48, 64
    %v50 = vpop.permute.xlu0 %49
    %vm51 = vcmask 589312
    %52 = vst.msk [vmem:[#allocation0] sm:$0x1] %vm51, %v50
    %s53 = scalar_lea.vmem %s0, 7
    %v54 = vld [vmem:[%s53] sm:$0x1]
    %55 = vrot.lane.b32.xlu0 %v54, 56
    %v56 = vpop.permute.xlu0 %55
    %vm57 = vcmask 523712
    %58 = vst.msk [vmem:[#allocation0] sm:$0x1] %vm57, %v56
    %s59 = scalar_lea.vmem %s0, 6
    %v60 = vld [vmem:[%s59] sm:$0x1]
    %61 = vrot.lane.b32.xlu0 %v60, 48
    %v62 = vpop.permute.xlu0 %61
    %vm63 = vcmask 458112
    %64 = vst.msk [vmem:[#allocation0] sm:$0x1] %vm63, %v62
    %s65 = scalar_lea.vmem %s0, 5
    %v66 = vld [vmem:[%s65] sm:$0x1]
    %67 = vrot.lane.b32.xlu0 %v66, 40
    %v68 = vpop.permute.xlu0 %67
    %vm69 = vcmask 392512
    %70 = vst.msk [vmem:[#allocation0] sm:$0x1] %vm69, %v68
    %s71 = scalar_lea.vmem %s0, 4
    %v72 = vld [vmem:[%s71] sm:$0x1]
    %73 = vrot.lane.b32.xlu0 %v72, 32
    %v74 = vpop.permute.xlu0 %73
    %vm75 = vcmask 326912
    %76 = vst.msk [vmem:[#allocation0] sm:$0x1] %vm75, %v74
    %s77 = scalar_lea.vmem %s0, 3
    %v78 = vld [vmem:[%s77] sm:$0x1]
    %79 = vrot.lane.b32.xlu0 %v78, 24
    %v80 = vpop.permute.xlu0 %79
    %vm81 = vcmask 261312
    %82 = vst.msk [vmem:[#allocation0] sm:$0x1] %vm81, %v80
    %s83 = scalar_lea.vmem %s0, 2
    %v84 = vld [vmem:[%s83] sm:$0x1]
    %85 = vrot.lane.b32.xlu0 %v84, 16
    %v86 = vpop.permute.xlu0 %85
    %vm87 = vcmask 195712
    %88 = vst.msk [vmem:[#allocation0] sm:$0x1] %vm87, %v86
    %s89 = scalar_lea.vmem %s0, 1
    %v90 = vld [vmem:[%s89] sm:$0x1]
    %91 = vrot.lane.b32.xlu0 %v90, 8
    %v92 = vpop.permute.xlu0 %91
    %vm93 = vcmask 130112
    %94 = vst.msk [vmem:[#allocation0] sm:$0x1] %vm93, %v92
    %s96 = sshll.u32 1, 1
    %s97 = ssub.s32 %s96, 1
    %v99 = vld [vmem:[#allocation0] sm:%s97]
    %s100 = sshll.u32 1, 1
    %s101 = ssub.s32 %s100, 1
    %102 = vst [vmem:[%s1] sm:%s101] %v99

// kernel: tile.19
$region0: #{tile.19}
  %s0 = inlined_call_operand.vmem [shape: f32[16,8], index: 0, kind: input, shape index: {}]
  %s1 = inlined_call_operand.vmem [shape: f32[1,128], index: 1, kind: output, shape index: {}]
  $region1: #{tile.19} parent=0
    #allocation0 [shape = 'u8[4096]{0}', space=vmem, size = 0x1000, scoped, tag = 'scoped mem for output reshape']
    %v2 = vld [vmem:[%s0] sm:$0x1]
    %vm3 = vcmask 64512
    %4 = vst.msk [vmem:[#allocation0] sm:$0x1] %vm3, %v2
    %s5 = scalar_lea.vmem %s0, 15
    %v6 = vld [vmem:[%s5] sm:$0x1]
    %7 = vrot.lane.b32.xlu0 %v6, 120
    %v8 = vpop.permute.xlu0 %7
    %vm9 = vcmask 1048512
    %10 = vst.msk [vmem:[#allocation0] sm:$0x1] %vm9, %v8
    %s11 = scalar_lea.vmem %s0, 14
    %v12 = vld [vmem:[%s11] sm:$0x1]
    %13 = vrot.lane.b32.xlu0 %v12, 112
    %v14 = vpop.permute.xlu0 %13
    %vm15 = vcmask 982912
    %16 = vst.msk [vmem:[#allocation0] sm:$0x1] %vm15, %v14
    %s17 = scalar_lea.vmem %s0, 13
    %v18 = vld [vmem:[%s17] sm:$0x1]
    %19 = vrot.lane.b32.xlu0 %v18, 104
    %v20 = vpop.permute.xlu0 %19
    %vm21 = vcmask 917312
    %22 = vst.msk [vmem:[#allocation0] sm:$0x1] %vm21, %v20
    %s23 = scalar_lea.vmem %s0, 12
    %v24 = vld [vmem:[%s23] sm:$0x1]
    %25 = vrot.lane.b32.xlu0 %v24, 96
    %v26 = vpop.permute.xlu0 %25
    %vm27 = vcmask 851712
    %28 = vst.msk [vmem:[#allocation0] sm:$0x1] %vm27, %v26
    %s29 = scalar_lea.vmem %s0, 11
    %v30 = vld [vmem:[%s29] sm:$0x1]
    %31 = vrot.lane.b32.xlu0 %v30, 88
    %v32 = vpop.permute.xlu0 %31
    %vm33 = vcmask 786112
    %34 = vst.msk [vmem:[#allocation0] sm:$0x1] %vm33, %v32
    %s35 = scalar_lea.vmem %s0, 10
    %v36 = vld [vmem:[%s35] sm:$0x1]
    %37 = vrot.lane.b32.xlu0 %v36, 80
    %v38 = vpop.permute.xlu0 %37
    %vm39 = vcmask 720512
    %40 = vst.msk [vmem:[#allocation0] sm:$0x1] %vm39, %v38
    %s41 = scalar_lea.vmem %s0, 9
    %v42 = vld [vmem:[%s41] sm:$0x1]
    %43 = vrot.lane.b32.xlu0 %v42, 72
    %v44 = vpop.permute.xlu0 %43
    %vm45 = vcmask 654912
    %46 = vst.msk [vmem:[#allocation0] sm:$0x1] %vm45, %v44
    %s47 = scalar_lea.vmem %s0, 8
    %v48 = vld [vmem:[%s47] sm:$0x1]
    %49 = vrot.lane.b32.xlu0 %v48, 64
    %v50 = vpop.permute.xlu0 %49
    %vm51 = vcmask 589312
    %52 = vst.msk [vmem:[#allocation0] sm:$0x1] %vm51, %v50
    %s53 = scalar_lea.vmem %s0, 7
    %v54 = vld [vmem:[%s53] sm:$0x1]
    %55 = vrot.lane.b32.xlu0 %v54, 56
    %v56 = vpop.permute.xlu0 %55
    %vm57 = vcmask 523712
    %58 = vst.msk [vmem:[#allocation0] sm:$0x1] %vm57, %v56
    %s59 = scalar_lea.vmem %s0, 6
    %v60 = vld [vmem:[%s59] sm:$0x1]
    %61 = vrot.lane.b32.xlu0 %v60, 48
    %v62 = vpop.permute.xlu0 %61
    %vm63 = vcmask 458112
    %64 = vst.msk [vmem:[#allocation0] sm:$0x1] %vm63, %v62
    %s65 = scalar_lea.vmem %s0, 5
    %v66 = vld [vmem:[%s65] sm:$0x1]
    %67 = vrot.lane.b32.xlu0 %v66, 40
    %v68 = vpop.permute.xlu0 %67
    %vm69 = vcmask 392512
    %70 = vst.msk [vmem:[#allocation0] sm:$0x1] %vm69, %v68
    %s71 = scalar_lea.vmem %s0, 4
    %v72 = vld [vmem:[%s71] sm:$0x1]
    %73 = vrot.lane.b32.xlu0 %v72, 32
    %v74 = vpop.permute.xlu0 %73
    %vm75 = vcmask 326912
    %76 = vst.msk [vmem:[#allocation0] sm:$0x1] %vm75, %v74
    %s77 = scalar_lea.vmem %s0, 3
    %v78 = vld [vmem:[%s77] sm:$0x1]
    %79 = vrot.lane.b32.xlu0 %v78, 24
    %v80 = vpop.permute.xlu0 %79
    %vm81 = vcmask 261312
    %82 = vst.msk [vmem:[#allocation0] sm:$0x1] %vm81, %v80
    %s83 = scalar_lea.vmem %s0, 2
    %v84 = vld [vmem:[%s83] sm:$0x1]
    %85 = vrot.lane.b32.xlu0 %v84, 16
    %v86 = vpop.permute.xlu0 %85
    %vm87 = vcmask 195712
    %88 = vst.msk [vmem:[#allocation0] sm:$0x1] %vm87, %v86
    %s89 = scalar_lea.vmem %s0, 1
    %v90 = vld [vmem:[%s89] sm:$0x1]
    %91 = vrot.lane.b32.xlu0 %v90, 8
    %v92 = vpop.permute.xlu0 %91
    %vm93 = vcmask 130112
    %94 = vst.msk [vmem:[#allocation0] sm:$0x1] %vm93, %v92
    %s96 = sshll.u32 1, 1
    %s97 = ssub.s32 %s96, 1
    %v99 = vld [vmem:[#allocation0] sm:%s97]
    %s100 = sshll.u32 1, 1
    %s101 = ssub.s32 %s100, 1
    %102 = vst [vmem:[%s1] sm:%s101] %v99

// kernel: phi1_forward.1
$region0: #{phi1_forward.1}
  #allocation0 [shape = 'u32[]', space=smem, size = 0x4, offset = 0x4, fixed_abs, tag = 'smem constant byte address 0x4 - core index']
  #allocation1 [shape = 'u32[144,128]{1,0:T(1,128)}', space=vmem, size = 0x12000, scoped, tag = 'internal scratch']
  %s0 = inlined_call_operand.vmem [shape: f32[32,160], index: 0, kind: input, shape index: {}]
  %s1 = inlined_call_operand.vmem [shape: f32[3,32,32], index: 1, kind: input, shape index: {}]
  %s2 = inlined_call_operand.vmem [shape: f32[3,160,128], index: 2, kind: input, shape index: {}]
  %s3 = inlined_call_operand.vmem [shape: f32[1,128], index: 3, kind: input, shape index: {}]
  %s4 = inlined_call_operand.vmem [shape: f32[6,128,128], index: 4, kind: input, shape index: {}]
  %s5 = inlined_call_operand.vmem [shape: f32[2,1,128], index: 5, kind: input, shape index: {}]
  %s6 = inlined_call_operand.vmem [shape: f32[32,128], index: 6, kind: output, shape index: {}]
  %s7 = sld [smem:[#allocation0]]
  $region34: #{phi1_forward.1} parent=0
    _
  %s9 = ssub.s32 1, %s7
  %s10 = scalar_select 0, %s9, %s7
  // Predicated region
  $region2: #{phi1_forward.1} parent=0 // pred_check
    _
  $region3: #{phi1_forward.1} parent=0 // pred_check_branch
    %12 = sbr.rel (0) target = $region5
  $region4: #{phi1_forward.1} parent=0 // pred_region
    _
  $region5: #{phi1_forward.1} parent=0 // pred_fallthru
    _
  // Predicated region
  $region6: #{phi1_forward.1} parent=0 // pred_check
    _
  $region7: #{phi1_forward.1} parent=0 // pred_check_branch
    %14 = sbr.rel (0) target = $region9
  $region8: #{phi1_forward.1} parent=0 // pred_region
    _
  $region9: #{phi1_forward.1} parent=0 // pred_fallthru
    _
  // Predicated region
  $region10: #{phi1_forward.1} parent=0 // pred_check
    _
  $region11: #{phi1_forward.1} parent=0 // pred_check_branch
    %16 = sbr.rel (0) target = $region13
  $region12: #{phi1_forward.1} parent=0 // pred_region
    _
  $region13: #{phi1_forward.1} parent=0 // pred_fallthru
    _
  // Predicated region
  $region14: #{phi1_forward.1} parent=0 // pred_check
    _
  $region15: #{phi1_forward.1} parent=0 // pred_check_branch
    %18 = sbr.rel (0) target = $region17
  $region16: #{phi1_forward.1} parent=0 // pred_region
    _
  $region17: #{phi1_forward.1} parent=0 // pred_fallthru
    _
  // Predicated region
  $region18: #{phi1_forward.1} parent=0 // pred_check
    _
  $region19: #{phi1_forward.1} parent=0 // pred_check_branch
    %20 = sbr.rel (0) target = $region21
  $region20: #{phi1_forward.1} parent=0 // pred_region
    _
  $region21: #{phi1_forward.1} parent=0 // pred_fallthru
    _
  // Predicated region
  $region22: #{phi1_forward.1} parent=0 // pred_check
    _
  $region23: #{phi1_forward.1} parent=0 // pred_check_branch
    %22 = sbr.rel (0) target = $region25
  $region24: #{phi1_forward.1} parent=0 // pred_region
    _
  $region25: #{phi1_forward.1} parent=0 // pred_fallthru
    _
  %v23 = vld [vmem:[%s0] sm:$0xff]
  %v24 = vld [vmem:[%s0 + $0x8] sm:$0xff]
  %v25 = vld [vmem:[%s0 + $0x10] sm:$0xff]
  %v26 = vld [vmem:[%s0 + $0x18] sm:$0xff]
  %v27 = vld [vmem:[%s0 + $0x20] sm:$0xff]
  %v28 = vld [vmem:[%s0 + $0x28] sm:$0xff]
  %v29 = vld [vmem:[%s0 + $0x30] sm:$0xff]
  %v30 = vld [vmem:[%s0 + $0x38] sm:$0xff]
  %v31 = vld [vmem:[%s3] sm:$0x1]
  %v33 = vlaneseq
  %v34 = vshrl.u32 %v33, 7
  %v35 = vsub.s32 0, %v34
  %v36 = vrot.slane %v31, %v35
  %v38 = vld [vmem:[%s2] sm:$0xff]
  %v39 = vld [vmem:[%s2 + $0x8] sm:$0xff]
  %v40 = vld [vmem:[%s2 + $0x10] sm:$0xff]
  %v41 = vld [vmem:[%s2 + $0x18] sm:$0xff]
  %v42 = vld [vmem:[%s2 + $0x20] sm:$0xff]
  %v43 = vld [vmem:[%s2 + $0x28] sm:$0xff]
  %v44 = vld [vmem:[%s2 + $0x30] sm:$0xff]
  %v45 = vld [vmem:[%s2 + $0x38] sm:$0xff]
  %v46 = vld [vmem:[%s2 + $0x40] sm:$0xff]
  %v47 = vld [vmem:[%s2 + $0x48] sm:$0xff]
  %v48 = vld [vmem:[%s2 + $0x50] sm:$0xff]
  %v49 = vld [vmem:[%s2 + $0x58] sm:$0xff]
  %v50 = vld [vmem:[%s2 + $0x60] sm:$0xff]
  %v51 = vld [vmem:[%s2 + $0x68] sm:$0xff]
  %v52 = vld [vmem:[%s2 + $0x70] sm:$0xff]
  %v53 = vld [vmem:[%s2 + $0x78] sm:$0xff]
  %v54 = vld [vmem:[%s2 + $0x80] sm:$0xff]
  %v55 = vld [vmem:[%s2 + $0x88] sm:$0xff]
  %v56 = vld [vmem:[%s2 + $0x90] sm:$0xff]
  %v57 = vld [vmem:[%s2 + $0x98] sm:$0xff]
  %vm58 = vcmask 261120
  %v60 = vsel %vm58, %v24, 0
  %v63 = vsel %vm58, %v26, 0
  %v66 = vsel %vm58, %v28, 0
  %v69 = vsel %vm58, %v30, 0
  %71 = vmatprep.subr.mxu0 0.0
  %72 = vmatpush1.msra.mxu0 %v53
  %73 = vmatprep.subr.mxu0 0.0
  %74 = vmatpush1.msra.mxu0 %v52
  %75 = vmatprep.subr.mxu0 0.0
  %76 = vmatpush1.msra.mxu0 %v51
  %77 = vmatprep.subr.mxu0 0.0
  %78 = vmatpush1.msra.mxu0 %v50
  %79 = vmatprep.subr.mxu0 0.0
  %80 = vmatpush1.msra.mxu0 %v49
  %81 = vmatprep.subr.mxu0 0.0
  %82 = vmatpush1.msra.mxu0 %v48
  %83 = vmatprep.subr.mxu0 0.0
  %84 = vmatpush1.msra.mxu0 %v47
  %85 = vmatprep.subr.mxu0 0.0
  %86 = vmatpush1.msra.mxu0 %v46
  %87 = vmatprep.subr.mxu0 0.0
  %88 = vmatpush1.msra.mxu0 %v45
  %89 = vmatprep.subr.mxu0 0.0
  %90 = vmatpush1.msra.mxu0 %v44
  %91 = vmatprep.subr.mxu0 0.0
  %92 = vmatpush1.msra.mxu0 %v43
  %93 = vmatprep.subr.mxu0 0.0
  %94 = vmatpush1.msra.mxu0 %v42
  %95 = vmatprep.subr.mxu0 0.0
  %96 = vmatpush1.msra.mxu0 %v41
  %97 = vmatprep.subr.mxu0 0.0
  %98 = vmatpush1.msra.mxu0 %v40
  %99 = vmatprep.subr.mxu0 0.0
  %100 = vmatpush1.msra.mxu0 %v39
  %101 = vmatprep.subr.mxu0 0.0
  %102 = vmatpush1.msra.mxu0 %v38
  %103 = vmatprep.subr.mxu0 0.0
  %104 = vmatpush2.msra.mxu0 0.0
  %105 = vmatprep.subr.mxu0 0.0
  %106 = vmatpush2.msra.mxu0 0.0
  %107 = vmatprep.subr.mxu0 0.0
  %108 = vmatpush2.msra.mxu0 0.0
  %109 = vmatprep.subr.mxu0 0.0
  %110 = vmatpush2.msra.mxu0 0.0
  %111 = vmatprep.subr.mxu0 0.0
  %112 = vmatpush2.msra.mxu0 0.0
  %113 = vmatprep.subr.mxu0 0.0
  %114 = vmatpush2.msra.mxu0 0.0
  %115 = vmatprep.subr.mxu0 0.0
  %116 = vmatpush2.msra.mxu0 0.0
  %117 = vmatprep.subr.mxu0 0.0
  %118 = vmatpush2.msra.mxu0 0.0
  %119 = vmatprep.subr.mxu0 0.0
  %120 = vmatpush2.msra.mxu0 0.0
  %121 = vmatprep.subr.mxu0 0.0
  %122 = vmatpush2.msra.mxu0 0.0
  %123 = vmatprep.subr.mxu0 0.0
  %124 = vmatpush2.msra.mxu0 0.0
  %125 = vmatprep.subr.mxu0 0.0
  %126 = vmatpush2.msra.mxu0 0.0
  %127 = vmatprep.subr.mxu0 0.0
  %128 = vmatpush2.msra.mxu0 %v57
  %129 = vmatprep.subr.mxu0 0.0
  %130 = vmatpush2.msra.mxu0 %v56
  %131 = vmatprep.subr.mxu0 0.0
  %132 = vmatpush2.msra.mxu0 %v55
  %133 = vmatprep.subr.mxu0 0.0
  %134 = vmatpush2.msra.mxu0 %v54
  %135 = vmatprep.mubr.f32.mxu0 %v60
  %136 = vmatmul.mubr.f32.gmra.mxu0 %v23
  %v137 = vpop.f32.mrf.mxu0
  %v138 = vadd.f32 0.0, %v137
  %v139 = vpop.f32.mrf.mxu0
  %140 = vmatprep.mubr.f32.mxu0 %v63
  %141 = vmatmul.mubr.f32.gmra.mxu0 %v25
  %v142 = vpop.f32.mrf.mxu0
  %v143 = vadd.f32 0.0, %v142
  %v144 = vpop.f32.mrf.mxu0
  %145 = vmatprep.mubr.f32.mxu0 %v66
  %146 = vmatmul.mubr.f32.gmra.mxu0 %v27
  %v147 = vpop.f32.mrf.mxu0
  %v148 = vadd.f32 0.0, %v147
  %v149 = vpop.f32.mrf.mxu0
  %150 = vmatprep.mubr.f32.mxu0 %v69
  %151 = vmatmul.mubr.f32.gmra.mxu0 %v29
  %v152 = vpop.f32.mrf.mxu0
  %v153 = vadd.f32 0.0, %v152
  %v154 = vpop.f32.mrf.mxu0
  %155 = vdwg.mxu0
  %v156 = vadd.f32 %v36, %v138
  %v157 = vadd.f32 %v36, %v143
  %v158 = vadd.f32 %v36, %v148
  %v159 = vadd.f32 %v36, %v153
  %s160 = scalar_lea.vmem %s1, 32
  %v161 = vld [vmem:[%s160] sm:$0xff]
  %v162 = vld [vmem:[%s160 + $0x8] sm:$0xff]
  %v163 = vld [vmem:[%s160 + $0x10] sm:$0xff]
  %v164 = vld [vmem:[%s160 + $0x18] sm:$0xff]
  %v166 = vsel %vm58, %v161, 0
  %v169 = vsel %vm58, %v162, 0
  %v172 = vsel %vm58, %v163, 0
  %v175 = vsel %vm58, %v164, 0
  %177 = vmatprep.subr.mxu0 0.0
  %178 = vmatpush1.msra.mxu0 0.0
  %179 = vmatprep.subr.mxu0 0.0
  %180 = vmatpush1.msra.mxu0 0.0
  %181 = vmatprep.subr.mxu0 0.0
  %182 = vmatpush1.msra.mxu0 0.0
  %183 = vmatprep.subr.mxu0 0.0
  %184 = vmatpush1.msra.mxu0 0.0
  %185 = vmatprep.subr.mxu0 0.0
  %186 = vmatpush1.msra.mxu0 0.0
  %187 = vmatprep.subr.mxu0 0.0
  %188 = vmatpush1.msra.mxu0 0.0
  %189 = vmatprep.subr.mxu0 0.0
  %190 = vmatpush1.msra.mxu0 0.0
  %191 = vmatprep.subr.mxu0 0.0
  %192 = vmatpush1.msra.mxu0 0.0
  %193 = vmatprep.subr.mxu0 0.0
  %194 = vmatpush1.msra.mxu0 0.0
  %195 = vmatprep.subr.mxu0 0.0
  %196 = vmatpush1.msra.mxu0 0.0
  %197 = vmatprep.subr.mxu0 0.0
  %198 = vmatpush1.msra.mxu0 0.0
  %199 = vmatprep.subr.mxu0 0.0
  %200 = vmatpush1.msra.mxu0 0.0
  %201 = vmatprep.subr.mxu0 %v30
  %202 = vmatpush1.msra.mxu0 %v29
  %203 = vmatprep.subr.mxu0 %v28
  %204 = vmatpush1.msra.mxu0 %v27
  %205 = vmatprep.subr.mxu0 %v26
  %206 = vmatpush1.msra.mxu0 %v25
  %207 = vmatprep.subr.mxu0 %v24
  %208 = vmatpush1.msra.mxu0 %v23
  %209 = vmatprep.subr.mxu0 0.0
  %210 = vmatpush2.msra.mxu0 0.0
  %211 = vmatprep.subr.mxu0 0.0
  %212 = vmatpush2.msra.mxu0 0.0
  %213 = vmatprep.subr.mxu0 0.0
  %214 = vmatpush2.msra.mxu0 0.0
  %215 = vmatprep.subr.mxu0 0.0
  %216 = vmatpush2.msra.mxu0 0.0
  %217 = vmatprep.subr.mxu0 0.0
  %218 = vmatpush2.msra.mxu0 0.0
  %219 = vmatprep.subr.mxu0 0.0
  %220 = vmatpush2.msra.mxu0 0.0
  %221 = vmatprep.subr.mxu0 0.0
  %222 = vmatpush2.msra.mxu0 0.0
  %223 = vmatprep.subr.mxu0 0.0
  %224 = vmatpush2.msra.mxu0 0.0
  %225 = vmatprep.subr.mxu0 0.0
  %226 = vmatpush2.msra.mxu0 0.0
  %227 = vmatprep.subr.mxu0 0.0
  %228 = vmatpush2.msra.mxu0 0.0
  %229 = vmatprep.subr.mxu0 0.0
  %230 = vmatpush2.msra.mxu0 0.0
  %231 = vmatprep.subr.mxu0 0.0
  %232 = vmatpush2.msra.mxu0 0.0
  %233 = vmatprep.subr.mxu0 0.0
  %234 = vmatpush2.msra.mxu0 0.0
  %235 = vmatprep.subr.mxu0 0.0
  %236 = vmatpush2.msra.mxu0 0.0
  %237 = vmatprep.subr.mxu0 0.0
  %238 = vmatpush2.msra.mxu0 0.0
  %239 = vmatprep.subr.mxu0 0.0
  %240 = vmatpush2.msra.mxu0 0.0
  %241 = vmatprep.mubr.f32.mxu0 0.0
  %242 = vmatmul.mubr.f32.gmra.mxu0 %v166
  %v243 = vpop.f32.mrf.mxu0
  %v244 = vadd.f32 0.0, %v243
  %v245 = vpop.f32.mrf.mxu0
  %v246 = vadd.f32 0.0, %v245
  %247 = vmatprep.mubr.f32.mxu0 0.0
  %248 = vmatmul.mubr.f32.gmra.mxu0 %v169
  %v249 = vpop.f32.mrf.mxu0
  %v250 = vadd.f32 0.0, %v249
  %v251 = vpop.f32.mrf.mxu0
  %v252 = vadd.f32 0.0, %v251
  %253 = vmatprep.mubr.f32.mxu0 0.0
  %254 = vmatmul.mubr.f32.gmra.mxu0 %v172
  %v255 = vpop.f32.mrf.mxu0
  %v256 = vadd.f32 0.0, %v255
  %v257 = vpop.f32.mrf.mxu0
  %v258 = vadd.f32 0.0, %v257
  %259 = vmatprep.mubr.f32.mxu0 0.0
  %260 = vmatmul.mubr.f32.gmra.mxu0 %v175
  %v261 = vpop.f32.mrf.mxu0
  %v262 = vadd.f32 0.0, %v261
  %v263 = vpop.f32.mrf.mxu0
  %v264 = vadd.f32 0.0, %v263
  %265 = vdwg.mxu0
  %s266 = scalar_lea.vmem %s2, 160
  %v267 = vld [vmem:[%s266] sm:$0xff]
  %v268 = vld [vmem:[%s266 + $0x8] sm:$0xff]
  %v269 = vld [vmem:[%s266 + $0x10] sm:$0xff]
  %v270 = vld [vmem:[%s266 + $0x18] sm:$0xff]
  %v271 = vld [vmem:[%s266 + $0x20] sm:$0xff]
  %v272 = vld [vmem:[%s266 + $0x28] sm:$0xff]
  %v273 = vld [vmem:[%s266 + $0x30] sm:$0xff]
  %v274 = vld [vmem:[%s266 + $0x38] sm:$0xff]
  %v275 = vld [vmem:[%s266 + $0x40] sm:$0xff]
  %v276 = vld [vmem:[%s266 + $0x48] sm:$0xff]
  %v277 = vld [vmem:[%s266 + $0x50] sm:$0xff]
  %v278 = vld [vmem:[%s266 + $0x58] sm:$0xff]
  %v279 = vld [vmem:[%s266 + $0x60] sm:$0xff]
  %v280 = vld [vmem:[%s266 + $0x68] sm:$0xff]
  %v281 = vld [vmem:[%s266 + $0x70] sm:$0xff]
  %v282 = vld [vmem:[%s266 + $0x78] sm:$0xff]
  %v283 = vld [vmem:[%s266 + $0x80] sm:$0xff]
  %v284 = vld [vmem:[%s266 + $0x88] sm:$0xff]
  %v285 = vld [vmem:[%s266 + $0x90] sm:$0xff]
  %v286 = vld [vmem:[%s266 + $0x98] sm:$0xff]
  %v288 = vsel %vm58, %v246, 0
  %v291 = vsel %vm58, %v252, 0
  %v294 = vsel %vm58, %v258, 0
  %v297 = vsel %vm58, %v264, 0
  %299 = vmatprep.subr.mxu0 0.0
  %300 = vmatpush1.msra.mxu0 %v282
  %301 = vmatprep.subr.mxu0 0.0
  %302 = vmatpush1.msra.mxu0 %v281
  %303 = vmatprep.subr.mxu0 0.0
  %304 = vmatpush1.msra.mxu0 %v280
  %305 = vmatprep.subr.mxu0 0.0
  %306 = vmatpush1.msra.mxu0 %v279
  %307 = vmatprep.subr.mxu0 0.0
  %308 = vmatpush1.msra.mxu0 %v278
  %309 = vmatprep.subr.mxu0 0.0
  %310 = vmatpush1.msra.mxu0 %v277
  %311 = vmatprep.subr.mxu0 0.0
  %312 = vmatpush1.msra.mxu0 %v276
  %313 = vmatprep.subr.mxu0 0.0
  %314 = vmatpush1.msra.mxu0 %v275
  %315 = vmatprep.subr.mxu0 0.0
  %316 = vmatpush1.msra.mxu0 %v274
  %317 = vmatprep.subr.mxu0 0.0
  %318 = vmatpush1.msra.mxu0 %v273
  %319 = vmatprep.subr.mxu0 0.0
  %320 = vmatpush1.msra.mxu0 %v272
  %321 = vmatprep.subr.mxu0 0.0
  %322 = vmatpush1.msra.mxu0 %v271
  %323 = vmatprep.subr.mxu0 0.0
  %324 = vmatpush1.msra.mxu0 %v270
  %325 = vmatprep.subr.mxu0 0.0
  %326 = vmatpush1.msra.mxu0 %v269
  %327 = vmatprep.subr.mxu0 0.0
  %328 = vmatpush1.msra.mxu0 %v268
  %329 = vmatprep.subr.mxu0 0.0
  %330 = vmatpush1.msra.mxu0 %v267
  %331 = vmatprep.subr.mxu0 0.0
  %332 = vmatpush2.msra.mxu0 0.0
  %333 = vmatprep.subr.mxu0 0.0
  %334 = vmatpush2.msra.mxu0 0.0
  %335 = vmatprep.subr.mxu0 0.0
  %336 = vmatpush2.msra.mxu0 0.0
  %337 = vmatprep.subr.mxu0 0.0
  %338 = vmatpush2.msra.mxu0 0.0
  %339 = vmatprep.subr.mxu0 0.0
  %340 = vmatpush2.msra.mxu0 0.0
  %341 = vmatprep.subr.mxu0 0.0
  %342 = vmatpush2.msra.mxu0 0.0
  %343 = vmatprep.subr.mxu0 0.0
  %344 = vmatpush2.msra.mxu0 0.0
  %345 = vmatprep.subr.mxu0 0.0
  %346 = vmatpush2.msra.mxu0 0.0
  %347 = vmatprep.subr.mxu0 0.0
  %348 = vmatpush2.msra.mxu0 0.0
  %349 = vmatprep.subr.mxu0 0.0
  %350 = vmatpush2.msra.mxu0 0.0
  %351 = vmatprep.subr.mxu0 0.0
  %352 = vmatpush2.msra.mxu0 0.0
  %353 = vmatprep.subr.mxu0 0.0
  %354 = vmatpush2.msra.mxu0 0.0
  %355 = vmatprep.subr.mxu0 0.0
  %356 = vmatpush2.msra.mxu0 %v286
  %357 = vmatprep.subr.mxu0 0.0
  %358 = vmatpush2.msra.mxu0 %v285
  %359 = vmatprep.subr.mxu0 0.0
  %360 = vmatpush2.msra.mxu0 %v284
  %361 = vmatprep.subr.mxu0 0.0
  %362 = vmatpush2.msra.mxu0 %v283
  %363 = vmatprep.mubr.f32.mxu0 %v288
  %364 = vmatmul.mubr.f32.gmra.mxu0 %v244
  %v365 = vpop.f32.mrf.mxu0
  %v366 = vadd.f32 0.0, %v365
  %v367 = vpop.f32.mrf.mxu0
  %368 = vmatprep.mubr.f32.mxu0 %v291
  %369 = vmatmul.mubr.f32.gmra.mxu0 %v250
  %v370 = vpop.f32.mrf.mxu0
  %v371 = vadd.f32 0.0, %v370
  %v372 = vpop.f32.mrf.mxu0
  %373 = vmatprep.mubr.f32.mxu0 %v294
  %374 = vmatmul.mubr.f32.gmra.mxu0 %v256
  %v375 = vpop.f32.mrf.mxu0
  %v376 = vadd.f32 0.0, %v375
  %v377 = vpop.f32.mrf.mxu0
  %378 = vmatprep.mubr.f32.mxu0 %v297
  %379 = vmatmul.mubr.f32.gmra.mxu0 %v262
  %v380 = vpop.f32.mrf.mxu0
  %v381 = vadd.f32 0.0, %v380
  %v382 = vpop.f32.mrf.mxu0
  %383 = vdwg.mxu0
  %v384 = vadd.f32 %v156, %v366
  %v385 = vadd.f32 %v157, %v371
  %v386 = vadd.f32 %v158, %v376
  %v387 = vadd.f32 %v159, %v381
  %s388 = scalar_lea.vmem %s1, 64
  %v389 = vld [vmem:[%s388] sm:$0xff]
  %v390 = vld [vmem:[%s388 + $0x8] sm:$0xff]
  %v391 = vld [vmem:[%s388 + $0x10] sm:$0xff]
  %v392 = vld [vmem:[%s388 + $0x18] sm:$0xff]
  %v394 = vsel %vm58, %v389, 0
  %v397 = vsel %vm58, %v390, 0
  %v400 = vsel %vm58, %v391, 0
  %v403 = vsel %vm58, %v392, 0
  %405 = vmatprep.subr.mxu0 0.0
  %406 = vmatpush1.msra.mxu0 0.0
  %407 = vmatprep.subr.mxu0 0.0
  %408 = vmatpush1.msra.mxu0 0.0
  %409 = vmatprep.subr.mxu0 0.0
  %410 = vmatpush1.msra.mxu0 0.0
  %411 = vmatprep.subr.mxu0 0.0
  %412 = vmatpush1.msra.mxu0 0.0
  %413 = vmatprep.subr.mxu0 0.0
  %414 = vmatpush1.msra.mxu0 0.0
  %415 = vmatprep.subr.mxu0 0.0
  %416 = vmatpush1.msra.mxu0 0.0
  %417 = vmatprep.subr.mxu0 0.0
  %418 = vmatpush1.msra.mxu0 0.0
  %419 = vmatprep.subr.mxu0 0.0
  %420 = vmatpush1.msra.mxu0 0.0
  %421 = vmatprep.subr.mxu0 0.0
  %422 = vmatpush1.msra.mxu0 0.0
  %423 = vmatprep.subr.mxu0 0.0
  %424 = vmatpush1.msra.mxu0 0.0
  %425 = vmatprep.subr.mxu0 0.0
  %426 = vmatpush1.msra.mxu0 0.0
  %427 = vmatprep.subr.mxu0 0.0
  %428 = vmatpush1.msra.mxu0 0.0
  %429 = vmatprep.subr.mxu0 %v30
  %430 = vmatpush1.msra.mxu0 %v29
  %431 = vmatprep.subr.mxu0 %v28
  %432 = vmatpush1.msra.mxu0 %v27
  %433 = vmatprep.subr.mxu0 %v26
  %434 = vmatpush1.msra.mxu0 %v25
  %435 = vmatprep.subr.mxu0 %v24
  %436 = vmatpush1.msra.mxu0 %v23
  %437 = vmatprep.subr.mxu0 0.0
  %438 = vmatpush2.msra.mxu0 0.0
  %439 = vmatprep.subr.mxu0 0.0
  %440 = vmatpush2.msra.mxu0 0.0
  %441 = vmatprep.subr.mxu0 0.0
  %442 = vmatpush2.msra.mxu0 0.0
  %443 = vmatprep.subr.mxu0 0.0
  %444 = vmatpush2.msra.mxu0 0.0
  %445 = vmatprep.subr.mxu0 0.0
  %446 = vmatpush2.msra.mxu0 0.0
  %447 = vmatprep.subr.mxu0 0.0
  %448 = vmatpush2.msra.mxu0 0.0
  %449 = vmatprep.subr.mxu0 0.0
  %450 = vmatpush2.msra.mxu0 0.0
  %451 = vmatprep.subr.mxu0 0.0
  %452 = vmatpush2.msra.mxu0 0.0
  %453 = vmatprep.subr.mxu0 0.0
  %454 = vmatpush2.msra.mxu0 0.0
  %455 = vmatprep.subr.mxu0 0.0
  %456 = vmatpush2.msra.mxu0 0.0
  %457 = vmatprep.subr.mxu0 0.0
  %458 = vmatpush2.msra.mxu0 0.0
  %459 = vmatprep.subr.mxu0 0.0
  %460 = vmatpush2.msra.mxu0 0.0
  %461 = vmatprep.subr.mxu0 0.0
  %462 = vmatpush2.msra.mxu0 0.0
  %463 = vmatprep.subr.mxu0 0.0
  %464 = vmatpush2.msra.mxu0 0.0
  %465 = vmatprep.subr.mxu0 0.0
  %466 = vmatpush2.msra.mxu0 0.0
  %467 = vmatprep.subr.mxu0 0.0
  %468 = vmatpush2.msra.mxu0 0.0
  %469 = vmatprep.mubr.f32.mxu0 0.0
  %470 = vmatmul.mubr.f32.gmra.mxu0 %v394
  %v471 = vpop.f32.mrf.mxu0
  %v472 = vadd.f32 0.0, %v471
  %v473 = vpop.f32.mrf.mxu0
  %v474 = vadd.f32 0.0, %v473
  %475 = vmatprep.mubr.f32.mxu0 0.0
  %476 = vmatmul.mubr.f32.gmra.mxu0 %v397
  %v477 = vpop.f32.mrf.mxu0
  %v478 = vadd.f32 0.0, %v477
  %v479 = vpop.f32.mrf.mxu0
  %v480 = vadd.f32 0.0, %v479
  %481 = vmatprep.mubr.f32.mxu0 0.0
  %482 = vmatmul.mubr.f32.gmra.mxu0 %v400
  %v483 = vpop.f32.mrf.mxu0
  %v484 = vadd.f32 0.0, %v483
  %v485 = vpop.f32.mrf.mxu0
  %v486 = vadd.f32 0.0, %v485
  %487 = vmatprep.mubr.f32.mxu0 0.0
  %488 = vmatmul.mubr.f32.gmra.mxu0 %v403
  %v489 = vpop.f32.mrf.mxu0
  %v490 = vadd.f32 0.0, %v489
  %v491 = vpop.f32.mrf.mxu0
  %v492 = vadd.f32 0.0, %v491
  %493 = vdwg.mxu0
  %s494 = scalar_lea.vmem %s2, 320
  %v495 = vld [vmem:[%s494] sm:$0xff]
  %v496 = vld [vmem:[%s494 + $0x8] sm:$0xff]
  %v497 = vld [vmem:[%s494 + $0x10] sm:$0xff]
  %v498 = vld [vmem:[%s494 + $0x18] sm:$0xff]
  %v499 = vld [vmem:[%s494 + $0x20] sm:$0xff]
  %v500 = vld [vmem:[%s494 + $0x28] sm:$0xff]
  %v501 = vld [vmem:[%s494 + $0x30] sm:$0xff]
  %v502 = vld [vmem:[%s494 + $0x38] sm:$0xff]
  %v503 = vld [vmem:[%s494 + $0x40] sm:$0xff]
  %v504 = vld [vmem:[%s494 + $0x48] sm:$0xff]
  %v505 = vld [vmem:[%s494 + $0x50] sm:$0xff]
  %v506 = vld [vmem:[%s494 + $0x58] sm:$0xff]
  %v507 = vld [vmem:[%s494 + $0x60] sm:$0xff]
  %v508 = vld [vmem:[%s494 + $0x68] sm:$0xff]
  %v509 = vld [vmem:[%s494 + $0x70] sm:$0xff]
  %v510 = vld [vmem:[%s494 + $0x78] sm:$0xff]
  %v511 = vld [vmem:[%s494 + $0x80] sm:$0xff]
  %v512 = vld [vmem:[%s494 + $0x88] sm:$0xff]
  %v513 = vld [vmem:[%s494 + $0x90] sm:$0xff]
  %v514 = vld [vmem:[%s494 + $0x98] sm:$0xff]
  %v516 = vsel %vm58, %v474, 0
  %v519 = vsel %vm58, %v480, 0
  %v522 = vsel %vm58, %v486, 0
  %v525 = vsel %vm58, %v492, 0
  %527 = vmatprep.subr.mxu0 0.0
  %528 = vmatpush1.msra.mxu0 %v510
  %529 = vmatprep.subr.mxu0 0.0
  %530 = vmatpush1.msra.mxu0 %v509
  %531 = vmatprep.subr.mxu0 0.0
  %532 = vmatpush1.msra.mxu0 %v508
  %533 = vmatprep.subr.mxu0 0.0
  %534 = vmatpush1.msra.mxu0 %v507
  %535 = vmatprep.subr.mxu0 0.0
  %536 = vmatpush1.msra.mxu0 %v506
  %537 = vmatprep.subr.mxu0 0.0
  %538 = vmatpush1.msra.mxu0 %v505
  %539 = vmatprep.subr.mxu0 0.0
  %540 = vmatpush1.msra.mxu0 %v504
  %541 = vmatprep.subr.mxu0 0.0
  %542 = vmatpush1.msra.mxu0 %v503
  %543 = vmatprep.subr.mxu0 0.0
  %544 = vmatpush1.msra.mxu0 %v502
  %545 = vmatprep.subr.mxu0 0.0
  %546 = vmatpush1.msra.mxu0 %v501
  %547 = vmatprep.subr.mxu0 0.0
  %548 = vmatpush1.msra.mxu0 %v500
  %549 = vmatprep.subr.mxu0 0.0
  %550 = vmatpush1.msra.mxu0 %v499
  %551 = vmatprep.subr.mxu0 0.0
  %552 = vmatpush1.msra.mxu0 %v498
  %553 = vmatprep.subr.mxu0 0.0
  %554 = vmatpush1.msra.mxu0 %v497
  %555 = vmatprep.subr.mxu0 0.0
  %556 = vmatpush1.msra.mxu0 %v496
  %557 = vmatprep.subr.mxu0 0.0
  %558 = vmatpush1.msra.mxu0 %v495
  %559 = vmatprep.subr.mxu0 0.0
  %560 = vmatpush2.msra.mxu0 0.0
  %561 = vmatprep.subr.mxu0 0.0
  %562 = vmatpush2.msra.mxu0 0.0
  %563 = vmatprep.subr.mxu0 0.0
  %564 = vmatpush2.msra.mxu0 0.0
  %565 = vmatprep.subr.mxu0 0.0
  %566 = vmatpush2.msra.mxu0 0.0
  %567 = vmatprep.subr.mxu0 0.0
  %568 = vmatpush2.msra.mxu0 0.0
  %569 = vmatprep.subr.mxu0 0.0
  %570 = vmatpush2.msra.mxu0 0.0
  %571 = vmatprep.subr.mxu0 0.0
  %572 = vmatpush2.msra.mxu0 0.0
  %573 = vmatprep.subr.mxu0 0.0
  %574 = vmatpush2.msra.mxu0 0.0
  %575 = vmatprep.subr.mxu0 0.0
  %576 = vmatpush2.msra.mxu0 0.0
  %577 = vmatprep.subr.mxu0 0.0
  %578 = vmatpush2.msra.mxu0 0.0
  %579 = vmatprep.subr.mxu0 0.0
  %580 = vmatpush2.msra.mxu0 0.0
  %581 = vmatprep.subr.mxu0 0.0
  %582 = vmatpush2.msra.mxu0 0.0
  %583 = vmatprep.subr.mxu0 0.0
  %584 = vmatpush2.msra.mxu0 %v514
  %585 = vmatprep.subr.mxu0 0.0
  %586 = vmatpush2.msra.mxu0 %v513
  %587 = vmatprep.subr.mxu0 0.0
  %588 = vmatpush2.msra.mxu0 %v512
  %589 = vmatprep.subr.mxu0 0.0
  %590 = vmatpush2.msra.mxu0 %v511
  %591 = vmatprep.mubr.f32.mxu0 %v516
  %592 = vmatmul.mubr.f32.gmra.mxu0 %v472
  %v593 = vpop.f32.mrf.mxu0
  %v594 = vadd.f32 0.0, %v593
  %v595 = vpop.f32.mrf.mxu0
  %596 = vmatprep.mubr.f32.mxu0 %v519
  %597 = vmatmul.mubr.f32.gmra.mxu0 %v478
  %v598 = vpop.f32.mrf.mxu0
  %v599 = vadd.f32 0.0, %v598
  %v600 = vpop.f32.mrf.mxu0
  %601 = vmatprep.mubr.f32.mxu0 %v522
  %602 = vmatmul.mubr.f32.gmra.mxu0 %v484
  %v603 = vpop.f32.mrf.mxu0
  %v604 = vadd.f32 0.0, %v603
  %v605 = vpop.f32.mrf.mxu0
  %606 = vmatprep.mubr.f32.mxu0 %v525
  %607 = vmatmul.mubr.f32.gmra.mxu0 %v490
  %v608 = vpop.f32.mrf.mxu0
  %v609 = vadd.f32 0.0, %v608
  %v610 = vpop.f32.mrf.mxu0
  %611 = vdwg.mxu0
  %v612 = vadd.f32 %v384, %v594
  %v613 = vadd.f32 %v385, %v599
  %v614 = vadd.f32 %v386, %v604
  %v615 = vadd.f32 %v387, %v609
  %v616 = vmax.f32 %v612, 0.0
  %v617 = vmax.f32 %v613, 0.0
  %v618 = vmax.f32 %v614, 0.0
  %v619 = vmax.f32 %v615, 0.0
  %v620 = vld [vmem:[%s5] sm:$0x1]
  %v622 = vlaneseq
  %v623 = vshrl.u32 %v622, 7
  %v624 = vsub.s32 0, %v623
  %v625 = vrot.slane %v620, %v624
  %v627 = vld [vmem:[%s4] sm:$0xff]
  %v628 = vld [vmem:[%s4 + $0x8] sm:$0xff]
  %v629 = vld [vmem:[%s4 + $0x10] sm:$0xff]
  %v630 = vld [vmem:[%s4 + $0x18] sm:$0xff]
  %v631 = vld [vmem:[%s4 + $0x20] sm:$0xff]
  %v632 = vld [vmem:[%s4 + $0x28] sm:$0xff]
  %v633 = vld [vmem:[%s4 + $0x30] sm:$0xff]
  %v634 = vld [vmem:[%s4 + $0x38] sm:$0xff]
  %v635 = vld [vmem:[%s4 + $0x40] sm:$0xff]
  %v636 = vld [vmem:[%s4 + $0x48] sm:$0xff]
  %v637 = vld [vmem:[%s4 + $0x50] sm:$0xff]
  %v638 = vld [vmem:[%s4 + $0x58] sm:$0xff]
  %v639 = vld [vmem:[%s4 + $0x60] sm:$0xff]
  %v640 = vld [vmem:[%s4 + $0x68] sm:$0xff]
  %v641 = vld [vmem:[%s4 + $0x70] sm:$0xff]
  %v642 = vld [vmem:[%s4 + $0x78] sm:$0xff]
  %643 = vmatprep.subr.mxu0 0.0
  %644 = vmatpush1.msra.mxu0 %v642
  %645 = vmatprep.subr.mxu0 0.0
  %646 = vmatpush1.msra.mxu0 %v641
  %647 = vmatprep.subr.mxu0 0.0
  %648 = vmatpush1.msra.mxu0 %v640
  %649 = vmatprep.subr.mxu0 0.0
  %650 = vmatpush1.msra.mxu0 %v639
  %651 = vmatprep.subr.mxu0 0.0
  %652 = vmatpush1.msra.mxu0 %v638
  %653 = vmatprep.subr.mxu0 0.0
  %654 = vmatpush1.msra.mxu0 %v637
  %655 = vmatprep.subr.mxu0 0.0
  %656 = vmatpush1.msra.mxu0 %v636
  %657 = vmatprep.subr.mxu0 0.0
  %658 = vmatpush1.msra.mxu0 %v635
  %659 = vmatprep.subr.mxu0 0.0
  %660 = vmatpush1.msra.mxu0 %v634
  %661 = vmatprep.subr.mxu0 0.0
  %662 = vmatpush1.msra.mxu0 %v633
  %663 = vmatprep.subr.mxu0 0.0
  %664 = vmatpush1.msra.mxu0 %v632
  %665 = vmatprep.subr.mxu0 0.0
  %666 = vmatpush1.msra.mxu0 %v631
  %667 = vmatprep.subr.mxu0 0.0
  %668 = vmatpush1.msra.mxu0 %v630
  %669 = vmatprep.subr.mxu0 0.0
  %670 = vmatpush1.msra.mxu0 %v629
  %671 = vmatprep.subr.mxu0 0.0
  %672 = vmatpush1.msra.mxu0 %v628
  %673 = vmatprep.subr.mxu0 0.0
  %674 = vmatpush1.msra.mxu0 %v627
  %675 = vmatprep.subr.mxu0 0.0
  %676 = vmatpush2.msra.mxu0 0.0
  %677 = vmatprep.subr.mxu0 0.0
  %678 = vmatpush2.msra.mxu0 0.0
  %679 = vmatprep.subr.mxu0 0.0
  %680 = vmatpush2.msra.mxu0 0.0
  %681 = vmatprep.subr.mxu0 0.0
  %682 = vmatpush2.msra.mxu0 0.0
  %683 = vmatprep.subr.mxu0 0.0
  %684 = vmatpush2.msra.mxu0 0.0
  %685 = vmatprep.subr.mxu0 0.0
  %686 = vmatpush2.msra.mxu0 0.0
  %687 = vmatprep.subr.mxu0 0.0
  %688 = vmatpush2.msra.mxu0 0.0
  %689 = vmatprep.subr.mxu0 0.0
  %690 = vmatpush2.msra.mxu0 0.0
  %691 = vmatprep.subr.mxu0 0.0
  %692 = vmatpush2.msra.mxu0 0.0
  %693 = vmatprep.subr.mxu0 0.0
  %694 = vmatpush2.msra.mxu0 0.0
  %695 = vmatprep.subr.mxu0 0.0
  %696 = vmatpush2.msra.mxu0 0.0
  %697 = vmatprep.subr.mxu0 0.0
  %698 = vmatpush2.msra.mxu0 0.0
  %699 = vmatprep.subr.mxu0 0.0
  %700 = vmatpush2.msra.mxu0 0.0
  %701 = vmatprep.subr.mxu0 0.0
  %702 = vmatpush2.msra.mxu0 0.0
  %703 = vmatprep.subr.mxu0 0.0
  %704 = vmatpush2.msra.mxu0 0.0
  %705 = vmatprep.subr.mxu0 0.0
  %706 = vmatpush2.msra.mxu0 0.0
  %707 = vmatprep.mubr.f32.mxu0 0.0
  %708 = vmatmul.mubr.f32.gmra.mxu0 %v616
  %v709 = vpop.f32.mrf.mxu0
  %v710 = vadd.f32 0.0, %v709
  %v711 = vpop.f32.mrf.mxu0
  %712 = vmatprep.mubr.f32.mxu0 0.0
  %713 = vmatmul.mubr.f32.gmra.mxu0 %v617
  %v714 = vpop.f32.mrf.mxu0
  %v715 = vadd.f32 0.0, %v714
  %v716 = vpop.f32.mrf.mxu0
  %717 = vmatprep.mubr.f32.mxu0 0.0
  %718 = vmatmul.mubr.f32.gmra.mxu0 %v618
  %v719 = vpop.f32.mrf.mxu0
  %v720 = vadd.f32 0.0, %v719
  %v721 = vpop.f32.mrf.mxu0
  %722 = vmatprep.mubr.f32.mxu0 0.0
  %723 = vmatmul.mubr.f32.gmra.mxu0 %v619
  %v724 = vpop.f32.mrf.mxu0
  %v725 = vadd.f32 0.0, %v724
  %v726 = vpop.f32.mrf.mxu0
  %727 = vdwg.mxu0
  %v728 = vadd.f32 %v625, %v710
  %v729 = vadd.f32 %v625, %v715
  %v730 = vadd.f32 %v625, %v720
  %v731 = vadd.f32 %v625, %v725
  %732 = vmatprep.subr.mxu0 0.0
  %733 = vmatpush1.msra.mxu0 0.0
  %734 = vmatprep.subr.mxu0 0.0
  %735 = vmatpush1.msra.mxu0 0.0
  %736 = vmatprep.subr.mxu0 0.0
  %737 = vmatpush1.msra.mxu0 0.0
  %738 = vmatprep.subr.mxu0 0.0
  %739 = vmatpush1.msra.mxu0 0.0
  %740 = vmatprep.subr.mxu0 0.0
  %741 = vmatpush1.msra.mxu0 0.0
  %742 = vmatprep.subr.mxu0 0.0
  %743 = vmatpush1.msra.mxu0 0.0
  %744 = vmatprep.subr.mxu0 0.0
  %745 = vmatpush1.msra.mxu0 0.0
  %746 = vmatprep.subr.mxu0 0.0
  %747 = vmatpush1.msra.mxu0 0.0
  %748 = vmatprep.subr.mxu0 0.0
  %749 = vmatpush1.msra.mxu0 0.0
  %750 = vmatprep.subr.mxu0 0.0
  %751 = vmatpush1.msra.mxu0 0.0
  %752 = vmatprep.subr.mxu0 0.0
  %753 = vmatpush1.msra.mxu0 0.0
  %754 = vmatprep.subr.mxu0 0.0
  %755 = vmatpush1.msra.mxu0 0.0
  %756 = vmatprep.subr.mxu0 0.0
  %757 = vmatpush1.msra.mxu0 %v619
  %758 = vmatprep.subr.mxu0 0.0
  %759 = vmatpush1.msra.mxu0 %v618
  %760 = vmatprep.subr.mxu0 0.0
  %761 = vmatpush1.msra.mxu0 %v617
  %762 = vmatprep.subr.mxu0 0.0
  %763 = vmatpush1.msra.mxu0 %v616
  %764 = vmatprep.subr.mxu0 0.0
  %765 = vmatpush2.msra.mxu0 0.0
  %766 = vmatprep.subr.mxu0 0.0
  %767 = vmatpush2.msra.mxu0 0.0
  %768 = vmatprep.subr.mxu0 0.0
  %769 = vmatpush2.msra.mxu0 0.0
  %770 = vmatprep.subr.mxu0 0.0
  %771 = vmatpush2.msra.mxu0 0.0
  %772 = vmatprep.subr.mxu0 0.0
  %773 = vmatpush2.msra.mxu0 0.0
  %774 = vmatprep.subr.mxu0 0.0
  %775 = vmatpush2.msra.mxu0 0.0
  %776 = vmatprep.subr.mxu0 0.0
  %777 = vmatpush2.msra.mxu0 0.0
  %778 = vmatprep.subr.mxu0 0.0
  %779 = vmatpush2.msra.mxu0 0.0
  %780 = vmatprep.subr.mxu0 0.0
  %781 = vmatpush2.msra.mxu0 0.0
  %782 = vmatprep.subr.mxu0 0.0
  %783 = vmatpush2.msra.mxu0 0.0
  %784 = vmatprep.subr.mxu0 0.0
  %785 = vmatpush2.msra.mxu0 0.0
  %786 = vmatprep.subr.mxu0 0.0
  %787 = vmatpush2.msra.mxu0 0.0
  %788 = vmatprep.subr.mxu0 0.0
  %789 = vmatpush2.msra.mxu0 0.0
  %790 = vmatprep.subr.mxu0 0.0
  %791 = vmatpush2.msra.mxu0 0.0
  %792 = vmatprep.subr.mxu0 0.0
  %793 = vmatpush2.msra.mxu0 0.0
  %794 = vmatprep.subr.mxu0 0.0
  %795 = vmatpush2.msra.mxu0 0.0
  %796 = vmatprep.mubr.f32.mxu0 0.0
  %797 = vmatmul.mubr.f32.gmra.mxu0 %v166
  %v798 = vpop.f32.mrf.mxu0
  %v799 = vadd.f32 0.0, %v798
  %v800 = vpop.f32.mrf.mxu0
  %801 = vmatprep.mubr.f32.mxu0 0.0
  %802 = vmatmul.mubr.f32.gmra.mxu0 %v169
  %v803 = vpop.f32.mrf.mxu0
  %v804 = vadd.f32 0.0, %v803
  %v805 = vpop.f32.mrf.mxu0
  %806 = vmatprep.mubr.f32.mxu0 0.0
  %807 = vmatmul.mubr.f32.gmra.mxu0 %v172
  %v808 = vpop.f32.mrf.mxu0
  %v809 = vadd.f32 0.0, %v808
  %v810 = vpop.f32.mrf.mxu0
  %811 = vmatprep.mubr.f32.mxu0 0.0
  %812 = vmatmul.mubr.f32.gmra.mxu0 %v175
  %v813 = vpop.f32.mrf.mxu0
  %v814 = vadd.f32 0.0, %v813
  %v815 = vpop.f32.mrf.mxu0
  %816 = vdwg.mxu0
  %s817 = scalar_lea.vmem %s4, 128
  %v818 = vld [vmem:[%s817] sm:$0xff]
  %v819 = vld [vmem:[%s817 + $0x8] sm:$0xff]
  %v820 = vld [vmem:[%s817 + $0x10] sm:$0xff]
  %v821 = vld [vmem:[%s817 + $0x18] sm:$0xff]
  %v822 = vld [vmem:[%s817 + $0x20] sm:$0xff]
  %v823 = vld [vmem:[%s817 + $0x28] sm:$0xff]
  %v824 = vld [vmem:[%s817 + $0x30] sm:$0xff]
  %v825 = vld [vmem:[%s817 + $0x38] sm:$0xff]
  %v826 = vld [vmem:[%s817 + $0x40] sm:$0xff]
  %v827 = vld [vmem:[%s817 + $0x48] sm:$0xff]
  %v828 = vld [vmem:[%s817 + $0x50] sm:$0xff]
  %v829 = vld [vmem:[%s817 + $0x58] sm:$0xff]
  %v830 = vld [vmem:[%s817 + $0x60] sm:$0xff]
  %v831 = vld [vmem:[%s817 + $0x68] sm:$0xff]
  %v832 = vld [vmem:[%s817 + $0x70] sm:$0xff]
  %v833 = vld [vmem:[%s817 + $0x78] sm:$0xff]
  %834 = vmatprep.subr.mxu0 0.0
  %835 = vmatpush1.msra.mxu0 %v833
  %836 = vmatprep.subr.mxu0 0.0
  %837 = vmatpush1.msra.mxu0 %v832
  %838 = vmatprep.subr.mxu0 0.0
  %839 = vmatpush1.msra.mxu0 %v831
  %840 = vmatprep.subr.mxu0 0.0
  %841 = vmatpush1.msra.mxu0 %v830
  %842 = vmatprep.subr.mxu0 0.0
  %843 = vmatpush1.msra.mxu0 %v829
  %844 = vmatprep.subr.mxu0 0.0
  %845 = vmatpush1.msra.mxu0 %v828
  %846 = vmatprep.subr.mxu0 0.0
  %847 = vmatpush1.msra.mxu0 %v827
  %848 = vmatprep.subr.mxu0 0.0
  %849 = vmatpush1.msra.mxu0 %v826
  %850 = vmatprep.subr.mxu0 0.0
  %851 = vmatpush1.msra.mxu0 %v825
  %852 = vmatprep.subr.mxu0 0.0
  %853 = vmatpush1.msra.mxu0 %v824
  %854 = vmatprep.subr.mxu0 0.0
  %855 = vmatpush1.msra.mxu0 %v823
  %856 = vmatprep.subr.mxu0 0.0
  %857 = vmatpush1.msra.mxu0 %v822
  %858 = vmatprep.subr.mxu0 0.0
  %859 = vmatpush1.msra.mxu0 %v821
  %860 = vmatprep.subr.mxu0 0.0
  %861 = vmatpush1.msra.mxu0 %v820
  %862 = vmatprep.subr.mxu0 0.0
  %863 = vmatpush1.msra.mxu0 %v819
  %864 = vmatprep.subr.mxu0 0.0
  %865 = vmatpush1.msra.mxu0 %v818
  %866 = vmatprep.subr.mxu0 0.0
  %867 = vmatpush2.msra.mxu0 0.0
  %868 = vmatprep.subr.mxu0 0.0
  %869 = vmatpush2.msra.mxu0 0.0
  %870 = vmatprep.subr.mxu0 0.0
  %871 = vmatpush2.msra.mxu0 0.0
  %872 = vmatprep.subr.mxu0 0.0
  %873 = vmatpush2.msra.mxu0 0.0
  %874 = vmatprep.subr.mxu0 0.0
  %875 = vmatpush2.msra.mxu0 0.0
  %876 = vmatprep.subr.mxu0 0.0
  %877 = vmatpush2.msra.mxu0 0.0
  %878 = vmatprep.subr.mxu0 0.0
  %879 = vmatpush2.msra.mxu0 0.0
  %880 = vmatprep.subr.mxu0 0.0
  %881 = vmatpush2.msra.mxu0 0.0
  %882 = vmatprep.subr.mxu0 0.0
  %883 = vmatpush2.msra.mxu0 0.0
  %884 = vmatprep.subr.mxu0 0.0
  %885 = vmatpush2.msra.mxu0 0.0
  %886 = vmatprep.subr.mxu0 0.0
  %887 = vmatpush2.msra.mxu0 0.0
  %888 = vmatprep.subr.mxu0 0.0
  %889 = vmatpush2.msra.mxu0 0.0
  %890 = vmatprep.subr.mxu0 0.0
  %891 = vmatpush2.msra.mxu0 0.0
  %892 = vmatprep.subr.mxu0 0.0
  %893 = vmatpush2.msra.mxu0 0.0
  %894 = vmatprep.subr.mxu0 0.0
  %895 = vmatpush2.msra.mxu0 0.0
  %896 = vmatprep.subr.mxu0 0.0
  %897 = vmatpush2.msra.mxu0 0.0
  %898 = vmatprep.mubr.f32.mxu0 0.0
  %899 = vmatmul.mubr.f32.gmra.mxu0 %v799
  %v900 = vpop.f32.mrf.mxu0
  %v901 = vadd.f32 0.0, %v900
  %v902 = vpop.f32.mrf.mxu0
  %903 = vmatprep.mubr.f32.mxu0 0.0
  %904 = vmatmul.mubr.f32.gmra.mxu0 %v804
  %v905 = vpop.f32.mrf.mxu0
  %v906 = vadd.f32 0.0, %v905
  %v907 = vpop.f32.mrf.mxu0
  %908 = vmatprep.mubr.f32.mxu0 0.0
  %909 = vmatmul.mubr.f32.gmra.mxu0 %v809
  %v910 = vpop.f32.mrf.mxu0
  %v911 = vadd.f32 0.0, %v910
  %v912 = vpop.f32.mrf.mxu0
  %913 = vmatprep.mubr.f32.mxu0 0.0
  %914 = vmatmul.mubr.f32.gmra.mxu0 %v814
  %v915 = vpop.f32.mrf.mxu0
  %v916 = vadd.f32 0.0, %v915
  %v917 = vpop.f32.mrf.mxu0
  %918 = vdwg.mxu0
  %v919 = vadd.f32 %v728, %v901
  %v920 = vadd.f32 %v729, %v906
  %v921 = vadd.f32 %v730, %v911
  %v922 = vadd.f32 %v731, %v916
  %923 = vmatprep.subr.mxu0 0.0
  %924 = vmatpush1.msra.mxu0 0.0
  %925 = vmatprep.subr.mxu0 0.0
  %926 = vmatpush1.msra.mxu0 0.0
  %927 = vmatprep.subr.mxu0 0.0
  %928 = vmatpush1.msra.mxu0 0.0
  %929 = vmatprep.subr.mxu0 0.0
  %930 = vmatpush1.msra.mxu0 0.0
  %931 = vmatprep.subr.mxu0 0.0
  %932 = vmatpush1.msra.mxu0 0.0
  %933 = vmatprep.subr.mxu0 0.0
  %934 = vmatpush1.msra.mxu0 0.0
  %935 = vmatprep.subr.mxu0 0.0
  %936 = vmatpush1.msra.mxu0 0.0
  %937 = vmatprep.subr.mxu0 0.0
  %938 = vmatpush1.msra.mxu0 0.0
  %939 = vmatprep.subr.mxu0 0.0
  %940 = vmatpush1.msra.mxu0 0.0
  %941 = vmatprep.subr.mxu0 0.0
  %942 = vmatpush1.msra.mxu0 0.0
  %943 = vmatprep.subr.mxu0 0.0
  %944 = vmatpush1.msra.mxu0 0.0
  %945 = vmatprep.subr.mxu0 0.0
  %946 = vmatpush1.msra.mxu0 0.0
  %947 = vmatprep.subr.mxu0 0.0
  %948 = vmatpush1.msra.mxu0 %v619
  %949 = vmatprep.subr.mxu0 0.0
  %950 = vmatpush1.msra.mxu0 %v618
  %951 = vmatprep.subr.mxu0 0.0
  %952 = vmatpush1.msra.mxu0 %v617
  %953 = vmatprep.subr.mxu0 0.0
  %954 = vmatpush1.msra.mxu0 %v616
  %955 = vmatprep.subr.mxu0 0.0
  %956 = vmatpush2.msra.mxu0 0.0
  %957 = vmatprep.subr.mxu0 0.0
  %958 = vmatpush2.msra.mxu0 0.0
  %959 = vmatprep.subr.mxu0 0.0
  %960 = vmatpush2.msra.mxu0 0.0
  %961 = vmatprep.subr.mxu0 0.0
  %962 = vmatpush2.msra.mxu0 0.0
  %963 = vmatprep.subr.mxu0 0.0
  %964 = vmatpush2.msra.mxu0 0.0
  %965 = vmatprep.subr.mxu0 0.0
  %966 = vmatpush2.msra.mxu0 0.0
  %967 = vmatprep.subr.mxu0 0.0
  %968 = vmatpush2.msra.mxu0 0.0
  %969 = vmatprep.subr.mxu0 0.0
  %970 = vmatpush2.msra.mxu0 0.0
  %971 = vmatprep.subr.mxu0 0.0
  %972 = vmatpush2.msra.mxu0 0.0
  %973 = vmatprep.subr.mxu0 0.0
  %974 = vmatpush2.msra.mxu0 0.0
  %975 = vmatprep.subr.mxu0 0.0
  %976 = vmatpush2.msra.mxu0 0.0
  %977 = vmatprep.subr.mxu0 0.0
  %978 = vmatpush2.msra.mxu0 0.0
  %979 = vmatprep.subr.mxu0 0.0
  %980 = vmatpush2.msra.mxu0 0.0
  %981 = vmatprep.subr.mxu0 0.0
  %982 = vmatpush2.msra.mxu0 0.0
  %983 = vmatprep.subr.mxu0 0.0
  %984 = vmatpush2.msra.mxu0 0.0
  %985 = vmatprep.subr.mxu0 0.0
  %986 = vmatpush2.msra.mxu0 0.0
  %987 = vmatprep.mubr.f32.mxu0 0.0
  %988 = vmatmul.mubr.f32.gmra.mxu0 %v394
  %v989 = vpop.f32.mrf.mxu0
  %v990 = vadd.f32 0.0, %v989
  %v991 = vpop.f32.mrf.mxu0
  %992 = vmatprep.mubr.f32.mxu0 0.0
  %993 = vmatmul.mubr.f32.gmra.mxu0 %v397
  %v994 = vpop.f32.mrf.mxu0
  %v995 = vadd.f32 0.0, %v994
  %v996 = vpop.f32.mrf.mxu0
  %997 = vmatprep.mubr.f32.mxu0 0.0
  %998 = vmatmul.mubr.f32.gmra.mxu0 %v400
  %v999 = vpop.f32.mrf.mxu0
  %v1000 = vadd.f32 0.0, %v999
  %v1001 = vpop.f32.mrf.mxu0
  %1002 = vmatprep.mubr.f32.mxu0 0.0
  %1003 = vmatmul.mubr.f32.gmra.mxu0 %v403
  %v1004 = vpop.f32.mrf.mxu0
  %v1005 = vadd.f32 0.0, %v1004
  %v1006 = vpop.f32.mrf.mxu0
  %1007 = vdwg.mxu0
  %s1008 = scalar_lea.vmem %s4, 256
  %v1009 = vld [vmem:[%s1008] sm:$0xff]
  %v1010 = vld [vmem:[%s1008 + $0x8] sm:$0xff]
  %v1011 = vld [vmem:[%s1008 + $0x10] sm:$0xff]
  %v1012 = vld [vmem:[%s1008 + $0x18] sm:$0xff]
  %v1013 = vld [vmem:[%s1008 + $0x20] sm:$0xff]
  %v1014 = vld [vmem:[%s1008 + $0x28] sm:$0xff]
  %v1015 = vld [vmem:[%s1008 + $0x30] sm:$0xff]
  %v1016 = vld [vmem:[%s1008 + $0x38] sm:$0xff]
  %v1017 = vld [vmem:[%s1008 + $0x40] sm:$0xff]
  %v1018 = vld [vmem:[%s1008 + $0x48] sm:$0xff]
  %v1019 = vld [vmem:[%s1008 + $0x50] sm:$0xff]
  %v1020 = vld [vmem:[%s1008 + $0x58] sm:$0xff]
  %v1021 = vld [vmem:[%s1008 + $0x60] sm:$0xff]
  %v1022 = vld [vmem:[%s1008 + $0x68] sm:$0xff]
  %v1023 = vld [vmem:[%s1008 + $0x70] sm:$0xff]
  %v1024 = vld [vmem:[%s1008 + $0x78] sm:$0xff]
  %1025 = vmatprep.subr.mxu0 0.0
  %1026 = vmatpush1.msra.mxu0 %v1024
  %1027 = vmatprep.subr.mxu0 0.0
  %1028 = vmatpush1.msra.mxu0 %v1023
  %1029 = vmatprep.subr.mxu0 0.0
  %1030 = vmatpush1.msra.mxu0 %v1022
  %1031 = vmatprep.subr.mxu0 0.0
  %1032 = vmatpush1.msra.mxu0 %v1021
  %1033 = vmatprep.subr.mxu0 0.0
  %1034 = vmatpush1.msra.mxu0 %v1020
  %1035 = vmatprep.subr.mxu0 0.0
  %1036 = vmatpush1.msra.mxu0 %v1019
  %1037 = vmatprep.subr.mxu0 0.0
  %1038 = vmatpush1.msra.mxu0 %v1018
  %1039 = vmatprep.subr.mxu0 0.0
  %1040 = vmatpush1.msra.mxu0 %v1017
  %1041 = vmatprep.subr.mxu0 0.0
  %1042 = vmatpush1.msra.mxu0 %v1016
  %1043 = vmatprep.subr.mxu0 0.0
  %1044 = vmatpush1.msra.mxu0 %v1015
  %1045 = vmatprep.subr.mxu0 0.0
  %1046 = vmatpush1.msra.mxu0 %v1014
  %1047 = vmatprep.subr.mxu0 0.0
  %1048 = vmatpush1.msra.mxu0 %v1013
  %1049 = vmatprep.subr.mxu0 0.0
  %1050 = vmatpush1.msra.mxu0 %v1012
  %1051 = vmatprep.subr.mxu0 0.0
  %1052 = vmatpush1.msra.mxu0 %v1011
  %1053 = vmatprep.subr.mxu0 0.0
  %1054 = vmatpush1.msra.mxu0 %v1010
  %1055 = vmatprep.subr.mxu0 0.0
  %1056 = vmatpush1.msra.mxu0 %v1009
  %1057 = vmatprep.subr.mxu0 0.0
  %1058 = vmatpush2.msra.mxu0 0.0
  %1059 = vmatprep.subr.mxu0 0.0
  %1060 = vmatpush2.msra.mxu0 0.0
  %1061 = vmatprep.subr.mxu0 0.0
  %1062 = vmatpush2.msra.mxu0 0.0
  %1063 = vmatprep.subr.mxu0 0.0
  %1064 = vmatpush2.msra.mxu0 0.0
  %1065 = vmatprep.subr.mxu0 0.0
  %1066 = vmatpush2.msra.mxu0 0.0
  %1067 = vmatprep.subr.mxu0 0.0
  %1068 = vmatpush2.msra.mxu0 0.0
  %1069 = vmatprep.subr.mxu0 0.0
  %1070 = vmatpush2.msra.mxu0 0.0
  %1071 = vmatprep.subr.mxu0 0.0
  %1072 = vmatpush2.msra.mxu0 0.0
  %1073 = vmatprep.subr.mxu0 0.0
  %1074 = vmatpush2.msra.mxu0 0.0
  %1075 = vmatprep.subr.mxu0 0.0
  %1076 = vmatpush2.msra.mxu0 0.0
  %1077 = vmatprep.subr.mxu0 0.0
  %1078 = vmatpush2.msra.mxu0 0.0
  %1079 = vmatprep.subr.mxu0 0.0
  %1080 = vmatpush2.msra.mxu0 0.0
  %1081 = vmatprep.subr.mxu0 0.0
  %1082 = vmatpush2.msra.mxu0 0.0
  %1083 = vmatprep.subr.mxu0 0.0
  %1084 = vmatpush2.msra.mxu0 0.0
  %1085 = vmatprep.subr.mxu0 0.0
  %1086 = vmatpush2.msra.mxu0 0.0
  %1087 = vmatprep.subr.mxu0 0.0
  %1088 = vmatpush2.msra.mxu0 0.0
  %1089 = vmatprep.mubr.f32.mxu0 0.0
  %1090 = vmatmul.mubr.f32.gmra.mxu0 %v990
  %v1091 = vpop.f32.mrf.mxu0
  %v1092 = vadd.f32 0.0, %v1091
  %v1093 = vpop.f32.mrf.mxu0
  %1094 = vmatprep.mubr.f32.mxu0 0.0
  %1095 = vmatmul.mubr.f32.gmra.mxu0 %v995
  %v1096 = vpop.f32.mrf.mxu0
  %v1097 = vadd.f32 0.0, %v1096
  %v1098 = vpop.f32.mrf.mxu0
  %1099 = vmatprep.mubr.f32.mxu0 0.0
  %1100 = vmatmul.mubr.f32.gmra.mxu0 %v1000
  %v1101 = vpop.f32.mrf.mxu0
  %v1102 = vadd.f32 0.0, %v1101
  %v1103 = vpop.f32.mrf.mxu0
  %1104 = vmatprep.mubr.f32.mxu0 0.0
  %1105 = vmatmul.mubr.f32.gmra.mxu0 %v1005
  %v1106 = vpop.f32.mrf.mxu0
  %v1107 = vadd.f32 0.0, %v1106
  %v1108 = vpop.f32.mrf.mxu0
  %1109 = vdwg.mxu0
  %v1110 = vadd.f32 %v919, %v1092
  %v1111 = vadd.f32 %v920, %v1097
  %v1112 = vadd.f32 %v921, %v1102
  %v1113 = vadd.f32 %v922, %v1107
  %v1114 = vmax.f32 %v1110, 0.0
  %v1115 = vmax.f32 %v1111, 0.0
  %v1116 = vmax.f32 %v1112, 0.0
  %v1117 = vmax.f32 %v1113, 0.0
  %s1118 = scalar_lea.vmem %s5, 1
  %v1119 = vld [vmem:[%s1118] sm:$0x1]
  %v1121 = vlaneseq
  %v1122 = vshrl.u32 %v1121, 7
  %v1123 = vsub.s32 0, %v1122
  %v1124 = vrot.slane %v1119, %v1123
  %s1126 = scalar_lea.vmem %s4, 384
  %v1127 = vld [vmem:[%s1126] sm:$0xff]
  %v1128 = vld [vmem:[%s1126 + $0x8] sm:$0xff]
  %v1129 = vld [vmem:[%s1126 + $0x10] sm:$0xff]
  %v1130 = vld [vmem:[%s1126 + $0x18] sm:$0xff]
  %v1131 = vld [vmem:[%s1126 + $0x20] sm:$0xff]
  %v1132 = vld [vmem:[%s1126 + $0x28] sm:$0xff]
  %v1133 = vld [vmem:[%s1126 + $0x30] sm:$0xff]
  %v1134 = vld [vmem:[%s1126 + $0x38] sm:$0xff]
  %v1135 = vld [vmem:[%s1126 + $0x40] sm:$0xff]
  %v1136 = vld [vmem:[%s1126 + $0x48] sm:$0xff]
  %v1137 = vld [vmem:[%s1126 + $0x50] sm:$0xff]
  %v1138 = vld [vmem:[%s1126 + $0x58] sm:$0xff]
  %v1139 = vld [vmem:[%s1126 + $0x60] sm:$0xff]
  %v1140 = vld [vmem:[%s1126 + $0x68] sm:$0xff]
  %v1141 = vld [vmem:[%s1126 + $0x70] sm:$0xff]
  %v1142 = vld [vmem:[%s1126 + $0x78] sm:$0xff]
  %1143 = vmatprep.subr.mxu0 0.0
  %1144 = vmatpush1.msra.mxu0 %v1142
  %1145 = vmatprep.subr.mxu0 0.0
  %1146 = vmatpush1.msra.mxu0 %v1141
  %1147 = vmatprep.subr.mxu0 0.0
  %1148 = vmatpush1.msra.mxu0 %v1140
  %1149 = vmatprep.subr.mxu0 0.0
  %1150 = vmatpush1.msra.mxu0 %v1139
  %1151 = vmatprep.subr.mxu0 0.0
  %1152 = vmatpush1.msra.mxu0 %v1138
  %1153 = vmatprep.subr.mxu0 0.0
  %1154 = vmatpush1.msra.mxu0 %v1137
  %1155 = vmatprep.subr.mxu0 0.0
  %1156 = vmatpush1.msra.mxu0 %v1136
  %1157 = vmatprep.subr.mxu0 0.0
  %1158 = vmatpush1.msra.mxu0 %v1135
  %1159 = vmatprep.subr.mxu0 0.0
  %1160 = vmatpush1.msra.mxu0 %v1134
  %1161 = vmatprep.subr.mxu0 0.0
  %1162 = vmatpush1.msra.mxu0 %v1133
  %1163 = vmatprep.subr.mxu0 0.0
  %1164 = vmatpush1.msra.mxu0 %v1132
  %1165 = vmatprep.subr.mxu0 0.0
  %1166 = vmatpush1.msra.mxu0 %v1131
  %1167 = vmatprep.subr.mxu0 0.0
  %1168 = vmatpush1.msra.mxu0 %v1130
  %1169 = vmatprep.subr.mxu0 0.0
  %1170 = vmatpush1.msra.mxu0 %v1129
  %1171 = vmatprep.subr.mxu0 0.0
  %1172 = vmatpush1.msra.mxu0 %v1128
  %1173 = vmatprep.subr.mxu0 0.0
  %1174 = vmatpush1.msra.mxu0 %v1127
  %1175 = vmatprep.subr.mxu0 0.0
  %1176 = vmatpush2.msra.mxu0 0.0
  %1177 = vmatprep.subr.mxu0 0.0
  %1178 = vmatpush2.msra.mxu0 0.0
  %1179 = vmatprep.subr.mxu0 0.0
  %1180 = vmatpush2.msra.mxu0 0.0
  %1181 = vmatprep.subr.mxu0 0.0
  %1182 = vmatpush2.msra.mxu0 0.0
  %1183 = vmatprep.subr.mxu0 0.0
  %1184 = vmatpush2.msra.mxu0 0.0
  %1185 = vmatprep.subr.mxu0 0.0
  %1186 = vmatpush2.msra.mxu0 0.0
  %1187 = vmatprep.subr.mxu0 0.0
  %1188 = vmatpush2.msra.mxu0 0.0
  %1189 = vmatprep.subr.mxu0 0.0
  %1190 = vmatpush2.msra.mxu0 0.0
  %1191 = vmatprep.subr.mxu0 0.0
  %1192 = vmatpush2.msra.mxu0 0.0
  %1193 = vmatprep.subr.mxu0 0.0
  %1194 = vmatpush2.msra.mxu0 0.0
  %1195 = vmatprep.subr.mxu0 0.0
  %1196 = vmatpush2.msra.mxu0 0.0
  %1197 = vmatprep.subr.mxu0 0.0
  %1198 = vmatpush2.msra.mxu0 0.0
  %1199 = vmatprep.subr.mxu0 0.0
  %1200 = vmatpush2.msra.mxu0 0.0
  %1201 = vmatprep.subr.mxu0 0.0
  %1202 = vmatpush2.msra.mxu0 0.0
  %1203 = vmatprep.subr.mxu0 0.0
  %1204 = vmatpush2.msra.mxu0 0.0
  %1205 = vmatprep.subr.mxu0 0.0
  %1206 = vmatpush2.msra.mxu0 0.0
  %1207 = vmatprep.mubr.f32.mxu0 0.0
  %1208 = vmatmul.mubr.f32.gmra.mxu0 %v1114
  %v1209 = vpop.f32.mrf.mxu0
  %v1210 = vadd.f32 0.0, %v1209
  %v1211 = vpop.f32.mrf.mxu0
  %1212 = vmatprep.mubr.f32.mxu0 0.0
  %1213 = vmatmul.mubr.f32.gmra.mxu0 %v1115
  %v1214 = vpop.f32.mrf.mxu0
  %v1215 = vadd.f32 0.0, %v1214
  %v1216 = vpop.f32.mrf.mxu0
  %1217 = vmatprep.mubr.f32.mxu0 0.0
  %1218 = vmatmul.mubr.f32.gmra.mxu0 %v1116
  %v1219 = vpop.f32.mrf.mxu0
  %v1220 = vadd.f32 0.0, %v1219
  %v1221 = vpop.f32.mrf.mxu0
  %1222 = vmatprep.mubr.f32.mxu0 0.0
  %1223 = vmatmul.mubr.f32.gmra.mxu0 %v1117
  %v1224 = vpop.f32.mrf.mxu0
  %v1225 = vadd.f32 0.0, %v1224
  %v1226 = vpop.f32.mrf.mxu0
  %1227 = vdwg.mxu0
  %v1228 = vadd.f32 %v1124, %v1210
  %v1229 = vadd.f32 %v1124, %v1215
  %v1230 = vadd.f32 %v1124, %v1220
  %v1231 = vadd.f32 %v1124, %v1225
  %1232 = vmatprep.subr.mxu0 0.0
  %1233 = vmatpush1.msra.mxu0 0.0
  %1234 = vmatprep.subr.mxu0 0.0
  %1235 = vmatpush1.msra.mxu0 0.0
  %1236 = vmatprep.subr.mxu0 0.0
  %1237 = vmatpush1.msra.mxu0 0.0
  %1238 = vmatprep.subr.mxu0 0.0
  %1239 = vmatpush1.msra.mxu0 0.0
  %1240 = vmatprep.subr.mxu0 0.0
  %1241 = vmatpush1.msra.mxu0 0.0
  %1242 = vmatprep.subr.mxu0 0.0
  %1243 = vmatpush1.msra.mxu0 0.0
  %1244 = vmatprep.subr.mxu0 0.0
  %1245 = vmatpush1.msra.mxu0 0.0
  %1246 = vmatprep.subr.mxu0 0.0
  %1247 = vmatpush1.msra.mxu0 0.0
  %1248 = vmatprep.subr.mxu0 0.0
  %1249 = vmatpush1.msra.mxu0 0.0
  %1250 = vmatprep.subr.mxu0 0.0
  %1251 = vmatpush1.msra.mxu0 0.0
  %1252 = vmatprep.subr.mxu0 0.0
  %1253 = vmatpush1.msra.mxu0 0.0
  %1254 = vmatprep.subr.mxu0 0.0
  %1255 = vmatpush1.msra.mxu0 0.0
  %1256 = vmatprep.subr.mxu0 0.0
  %1257 = vmatpush1.msra.mxu0 %v1117
  %1258 = vmatprep.subr.mxu0 0.0
  %1259 = vmatpush1.msra.mxu0 %v1116
  %1260 = vmatprep.subr.mxu0 0.0
  %1261 = vmatpush1.msra.mxu0 %v1115
  %1262 = vmatprep.subr.mxu0 0.0
  %1263 = vmatpush1.msra.mxu0 %v1114
  %1264 = vmatprep.subr.mxu0 0.0
  %1265 = vmatpush2.msra.mxu0 0.0
  %1266 = vmatprep.subr.mxu0 0.0
  %1267 = vmatpush2.msra.mxu0 0.0
  %1268 = vmatprep.subr.mxu0 0.0
  %1269 = vmatpush2.msra.mxu0 0.0
  %1270 = vmatprep.subr.mxu0 0.0
  %1271 = vmatpush2.msra.mxu0 0.0
  %1272 = vmatprep.subr.mxu0 0.0
  %1273 = vmatpush2.msra.mxu0 0.0
  %1274 = vmatprep.subr.mxu0 0.0
  %1275 = vmatpush2.msra.mxu0 0.0
  %1276 = vmatprep.subr.mxu0 0.0
  %1277 = vmatpush2.msra.mxu0 0.0
  %1278 = vmatprep.subr.mxu0 0.0
  %1279 = vmatpush2.msra.mxu0 0.0
  %1280 = vmatprep.subr.mxu0 0.0
  %1281 = vmatpush2.msra.mxu0 0.0
  %1282 = vmatprep.subr.mxu0 0.0
  %1283 = vmatpush2.msra.mxu0 0.0
  %1284 = vmatprep.subr.mxu0 0.0
  %1285 = vmatpush2.msra.mxu0 0.0
  %1286 = vmatprep.subr.mxu0 0.0
  %1287 = vmatpush2.msra.mxu0 0.0
  %1288 = vmatprep.subr.mxu0 0.0
  %1289 = vmatpush2.msra.mxu0 0.0
  %1290 = vmatprep.subr.mxu0 0.0
  %1291 = vmatpush2.msra.mxu0 0.0
  %1292 = vmatprep.subr.mxu0 0.0
  %1293 = vmatpush2.msra.mxu0 0.0
  %1294 = vmatprep.subr.mxu0 0.0
  %1295 = vmatpush2.msra.mxu0 0.0
  %1296 = vmatprep.mubr.f32.mxu0 0.0
  %1297 = vmatmul.mubr.f32.gmra.mxu0 %v166
  %v1298 = vpop.f32.mrf.mxu0
  %v1299 = vadd.f32 0.0, %v1298
  %v1300 = vpop.f32.mrf.mxu0
  %1301 = vmatprep.mubr.f32.mxu0 0.0
  %1302 = vmatmul.mubr.f32.gmra.mxu0 %v169
  %v1303 = vpop.f32.mrf.mxu0
  %v1304 = vadd.f32 0.0, %v1303
  %v1305 = vpop.f32.mrf.mxu0
  %1306 = vmatprep.mubr.f32.mxu0 0.0
  %1307 = vmatmul.mubr.f32.gmra.mxu0 %v172
  %v1308 = vpop.f32.mrf.mxu0
  %v1309 = vadd.f32 0.0, %v1308
  %v1310 = vpop.f32.mrf.mxu0
  %1311 = vmatprep.mubr.f32.mxu0 0.0
  %1312 = vmatmul.mubr.f32.gmra.mxu0 %v175
  %v1313 = vpop.f32.mrf.mxu0
  %v1314 = vadd.f32 0.0, %v1313
  %v1315 = vpop.f32.mrf.mxu0
  %1316 = vdwg.mxu0
  %s1317 = scalar_lea.vmem %s4, 512
  %v1318 = vld [vmem:[%s1317] sm:$0xff]
  %v1319 = vld [vmem:[%s1317 + $0x8] sm:$0xff]
  %v1320 = vld [vmem:[%s1317 + $0x10] sm:$0xff]
  %v1321 = vld [vmem:[%s1317 + $0x18] sm:$0xff]
  %v1322 = vld [vmem:[%s1317 + $0x20] sm:$0xff]
  %v1323 = vld [vmem:[%s1317 + $0x28] sm:$0xff]
  %v1324 = vld [vmem:[%s1317 + $0x30] sm:$0xff]
  %v1325 = vld [vmem:[%s1317 + $0x38] sm:$0xff]
  %v1326 = vld [vmem:[%s1317 + $0x40] sm:$0xff]
  %v1327 = vld [vmem:[%s1317 + $0x48] sm:$0xff]
  %v1328 = vld [vmem:[%s1317 + $0x50] sm:$0xff]
  %v1329 = vld [vmem:[%s1317 + $0x58] sm:$0xff]
  %v1330 = vld [vmem:[%s1317 + $0x60] sm:$0xff]
  %v1331 = vld [vmem:[%s1317 + $0x68] sm:$0xff]
  %v1332 = vld [vmem:[%s1317 + $0x70] sm:$0xff]
  %v1333 = vld [vmem:[%s1317 + $0x78] sm:$0xff]
  %1334 = vmatprep.subr.mxu0 0.0
  %1335 = vmatpush1.msra.mxu0 %v1333
  %1336 = vmatprep.subr.mxu0 0.0
  %1337 = vmatpush1.msra.mxu0 %v1332
  %1338 = vmatprep.subr.mxu0 0.0
  %1339 = vmatpush1.msra.mxu0 %v1331
  %1340 = vmatprep.subr.mxu0 0.0
  %1341 = vmatpush1.msra.mxu0 %v1330
  %1342 = vmatprep.subr.mxu0 0.0
  %1343 = vmatpush1.msra.mxu0 %v1329
  %1344 = vmatprep.subr.mxu0 0.0
  %1345 = vmatpush1.msra.mxu0 %v1328
  %1346 = vmatprep.subr.mxu0 0.0
  %1347 = vmatpush1.msra.mxu0 %v1327
  %1348 = vmatprep.subr.mxu0 0.0
  %1349 = vmatpush1.msra.mxu0 %v1326
  %1350 = vmatprep.subr.mxu0 0.0
  %1351 = vmatpush1.msra.mxu0 %v1325
  %1352 = vmatprep.subr.mxu0 0.0
  %1353 = vmatpush1.msra.mxu0 %v1324
  %1354 = vmatprep.subr.mxu0 0.0
  %1355 = vmatpush1.msra.mxu0 %v1323
  %1356 = vmatprep.subr.mxu0 0.0
  %1357 = vmatpush1.msra.mxu0 %v1322
  %1358 = vmatprep.subr.mxu0 0.0
  %1359 = vmatpush1.msra.mxu0 %v1321
  %1360 = vmatprep.subr.mxu0 0.0
  %1361 = vmatpush1.msra.mxu0 %v1320
  %1362 = vmatprep.subr.mxu0 0.0
  %1363 = vmatpush1.msra.mxu0 %v1319
  %1364 = vmatprep.subr.mxu0 0.0
  %1365 = vmatpush1.msra.mxu0 %v1318
  %1366 = vmatprep.subr.mxu0 0.0
  %1367 = vmatpush2.msra.mxu0 0.0
  %1368 = vmatprep.subr.mxu0 0.0
  %1369 = vmatpush2.msra.mxu0 0.0
  %1370 = vmatprep.subr.mxu0 0.0
  %1371 = vmatpush2.msra.mxu0 0.0
  %1372 = vmatprep.subr.mxu0 0.0
  %1373 = vmatpush2.msra.mxu0 0.0
  %1374 = vmatprep.subr.mxu0 0.0
  %1375 = vmatpush2.msra.mxu0 0.0
  %1376 = vmatprep.subr.mxu0 0.0
  %1377 = vmatpush2.msra.mxu0 0.0
  %1378 = vmatprep.subr.mxu0 0.0
  %1379 = vmatpush2.msra.mxu0 0.0
  %1380 = vmatprep.subr.mxu0 0.0
  %1381 = vmatpush2.msra.mxu0 0.0
  %1382 = vmatprep.subr.mxu0 0.0
  %1383 = vmatpush2.msra.mxu0 0.0
  %1384 = vmatprep.subr.mxu0 0.0
  %1385 = vmatpush2.msra.mxu0 0.0
  %1386 = vmatprep.subr.mxu0 0.0
  %1387 = vmatpush2.msra.mxu0 0.0
  %1388 = vmatprep.subr.mxu0 0.0
  %1389 = vmatpush2.msra.mxu0 0.0
  %1390 = vmatprep.subr.mxu0 0.0
  %1391 = vmatpush2.msra.mxu0 0.0
  %1392 = vmatprep.subr.mxu0 0.0
  %1393 = vmatpush2.msra.mxu0 0.0
  %1394 = vmatprep.subr.mxu0 0.0
  %1395 = vmatpush2.msra.mxu0 0.0
  %1396 = vmatprep.subr.mxu0 0.0
  %1397 = vmatpush2.msra.mxu0 0.0
  %1398 = vmatprep.mubr.f32.mxu0 0.0
  %1399 = vmatmul.mubr.f32.gmra.mxu0 %v1299
  %v1400 = vpop.f32.mrf.mxu0
  %v1401 = vadd.f32 0.0, %v1400
  %v1402 = vpop.f32.mrf.mxu0
  %1403 = vmatprep.mubr.f32.mxu0 0.0
  %1404 = vmatmul.mubr.f32.gmra.mxu0 %v1304
  %v1405 = vpop.f32.mrf.mxu0
  %v1406 = vadd.f32 0.0, %v1405
  %v1407 = vpop.f32.mrf.mxu0
  %1408 = vmatprep.mubr.f32.mxu0 0.0
  %1409 = vmatmul.mubr.f32.gmra.mxu0 %v1309
  %v1410 = vpop.f32.mrf.mxu0
  %v1411 = vadd.f32 0.0, %v1410
  %v1412 = vpop.f32.mrf.mxu0
  %1413 = vmatprep.mubr.f32.mxu0 0.0
  %1414 = vmatmul.mubr.f32.gmra.mxu0 %v1314
  %v1415 = vpop.f32.mrf.mxu0
  %v1416 = vadd.f32 0.0, %v1415
  %v1417 = vpop.f32.mrf.mxu0
  %1418 = vdwg.mxu0
  %v1419 = vadd.f32 %v1228, %v1401
  %v1420 = vadd.f32 %v1229, %v1406
  %v1421 = vadd.f32 %v1230, %v1411
  %v1422 = vadd.f32 %v1231, %v1416
  %1423 = vmatprep.subr.mxu0 0.0
  %1424 = vmatpush1.msra.mxu0 0.0
  %1425 = vmatprep.subr.mxu0 0.0
  %1426 = vmatpush1.msra.mxu0 0.0
  %1427 = vmatprep.subr.mxu0 0.0
  %1428 = vmatpush1.msra.mxu0 0.0
  %1429 = vmatprep.subr.mxu0 0.0
  %1430 = vmatpush1.msra.mxu0 0.0
  %1431 = vmatprep.subr.mxu0 0.0
  %1432 = vmatpush1.msra.mxu0 0.0
  %1433 = vmatprep.subr.mxu0 0.0
  %1434 = vmatpush1.msra.mxu0 0.0
  %1435 = vmatprep.subr.mxu0 0.0
  %1436 = vmatpush1.msra.mxu0 0.0
  %1437 = vmatprep.subr.mxu0 0.0
  %1438 = vmatpush1.msra.mxu0 0.0
  %1439 = vmatprep.subr.mxu0 0.0
  %1440 = vmatpush1.msra.mxu0 0.0
  %1441 = vmatprep.subr.mxu0 0.0
  %1442 = vmatpush1.msra.mxu0 0.0
  %1443 = vmatprep.subr.mxu0 0.0
  %1444 = vmatpush1.msra.mxu0 0.0
  %1445 = vmatprep.subr.mxu0 0.0
  %1446 = vmatpush1.msra.mxu0 0.0
  %1447 = vmatprep.subr.mxu0 0.0
  %1448 = vmatpush1.msra.mxu0 %v1117
  %1449 = vmatprep.subr.mxu0 0.0
  %1450 = vmatpush1.msra.mxu0 %v1116
  %1451 = vmatprep.subr.mxu0 0.0
  %1452 = vmatpush1.msra.mxu0 %v1115
  %1453 = vmatprep.subr.mxu0 0.0
  %1454 = vmatpush1.msra.mxu0 %v1114
  %1455 = vmatprep.subr.mxu0 0.0
  %1456 = vmatpush2.msra.mxu0 0.0
  %1457 = vmatprep.subr.mxu0 0.0
  %1458 = vmatpush2.msra.mxu0 0.0
  %1459 = vmatprep.subr.mxu0 0.0
  %1460 = vmatpush2.msra.mxu0 0.0
  %1461 = vmatprep.subr.mxu0 0.0
  %1462 = vmatpush2.msra.mxu0 0.0
  %1463 = vmatprep.subr.mxu0 0.0
  %1464 = vmatpush2.msra.mxu0 0.0
  %1465 = vmatprep.subr.mxu0 0.0
  %1466 = vmatpush2.msra.mxu0 0.0
  %1467 = vmatprep.subr.mxu0 0.0
  %1468 = vmatpush2.msra.mxu0 0.0
  %1469 = vmatprep.subr.mxu0 0.0
  %1470 = vmatpush2.msra.mxu0 0.0
  %1471 = vmatprep.subr.mxu0 0.0
  %1472 = vmatpush2.msra.mxu0 0.0
  %1473 = vmatprep.subr.mxu0 0.0
  %1474 = vmatpush2.msra.mxu0 0.0
  %1475 = vmatprep.subr.mxu0 0.0
  %1476 = vmatpush2.msra.mxu0 0.0
  %1477 = vmatprep.subr.mxu0 0.0
  %1478 = vmatpush2.msra.mxu0 0.0
  %1479 = vmatprep.subr.mxu0 0.0
  %1480 = vmatpush2.msra.mxu0 0.0
  %1481 = vmatprep.subr.mxu0 0.0
  %1482 = vmatpush2.msra.mxu0 0.0
  %1483 = vmatprep.subr.mxu0 0.0
  %1484 = vmatpush2.msra.mxu0 0.0
  %1485 = vmatprep.subr.mxu0 0.0
  %1486 = vmatpush2.msra.mxu0 0.0
  %1487 = vmatprep.mubr.f32.mxu0 0.0
  %1488 = vmatmul.mubr.f32.gmra.mxu0 %v394
  %v1489 = vpop.f32.mrf.mxu0
  %v1490 = vadd.f32 0.0, %v1489
  %v1491 = vpop.f32.mrf.mxu0
  %1492 = vmatprep.mubr.f32.mxu0 0.0
  %1493 = vmatmul.mubr.f32.gmra.mxu0 %v397
  %v1494 = vpop.f32.mrf.mxu0
  %v1495 = vadd.f32 0.0, %v1494
  %v1496 = vpop.f32.mrf.mxu0
  %1497 = vmatprep.mubr.f32.mxu0 0.0
  %1498 = vmatmul.mubr.f32.gmra.mxu0 %v400
  %v1499 = vpop.f32.mrf.mxu0
  %v1500 = vadd.f32 0.0, %v1499
  %v1501 = vpop.f32.mrf.mxu0
  %1502 = vmatprep.mubr.f32.mxu0 0.0
  %1503 = vmatmul.mubr.f32.gmra.mxu0 %v403
  %v1504 = vpop.f32.mrf.mxu0
  %v1505 = vadd.f32 0.0, %v1504
  %v1506 = vpop.f32.mrf.mxu0
  %1507 = vdwg.mxu0
  %s1508 = scalar_lea.vmem %s4, 640
  %v1509 = vld [vmem:[%s1508] sm:$0xff]
  %v1510 = vld [vmem:[%s1508 + $0x8] sm:$0xff]
  %v1511 = vld [vmem:[%s1508 + $0x10] sm:$0xff]
  %v1512 = vld [vmem:[%s1508 + $0x18] sm:$0xff]
  %v1513 = vld [vmem:[%s1508 + $0x20] sm:$0xff]
  %v1514 = vld [vmem:[%s1508 + $0x28] sm:$0xff]
  %v1515 = vld [vmem:[%s1508 + $0x30] sm:$0xff]
  %v1516 = vld [vmem:[%s1508 + $0x38] sm:$0xff]
  %v1517 = vld [vmem:[%s1508 + $0x40] sm:$0xff]
  %v1518 = vld [vmem:[%s1508 + $0x48] sm:$0xff]
  %v1519 = vld [vmem:[%s1508 + $0x50] sm:$0xff]
  %v1520 = vld [vmem:[%s1508 + $0x58] sm:$0xff]
  %v1521 = vld [vmem:[%s1508 + $0x60] sm:$0xff]
  %v1522 = vld [vmem:[%s1508 + $0x68] sm:$0xff]
  %v1523 = vld [vmem:[%s1508 + $0x70] sm:$0xff]
  %v1524 = vld [vmem:[%s1508 + $0x78] sm:$0xff]
  %1525 = vmatprep.subr.mxu0 0.0
  %1526 = vmatpush1.msra.mxu0 %v1524
  %1527 = vmatprep.subr.mxu0 0.0
  %1528 = vmatpush1.msra.mxu0 %v1523
  %1529 = vmatprep.subr.mxu0 0.0
  %1530 = vmatpush1.msra.mxu0 %v1522
  %1531 = vmatprep.subr.mxu0 0.0
  %1532 = vmatpush1.msra.mxu0 %v1521
  %1533 = vmatprep.subr.mxu0 0.0
  %1534 = vmatpush1.msra.mxu0 %v1520
  %1535 = vmatprep.subr.mxu0 0.0
  %1536 = vmatpush1.msra.mxu0 %v1519
  %1537 = vmatprep.subr.mxu0 0.0
  %1538 = vmatpush1.msra.mxu0 %v1518
  %1539 = vmatprep.subr.mxu0 0.0
  %1540 = vmatpush1.msra.mxu0 %v1517
  %1541 = vmatprep.subr.mxu0 0.0
  %1542 = vmatpush1.msra.mxu0 %v1516
  %1543 = vmatprep.subr.mxu0 0.0
  %1544 = vmatpush1.msra.mxu0 %v1515
  %1545 = vmatprep.subr.mxu0 0.0
  %1546 = vmatpush1.msra.mxu0 %v1514
  %1547 = vmatprep.subr.mxu0 0.0
  %1548 = vmatpush1.msra.mxu0 %v1513
  %1549 = vmatprep.subr.mxu0 0.0
  %1550 = vmatpush1.msra.mxu0 %v1512
  %1551 = vmatprep.subr.mxu0 0.0
  %1552 = vmatpush1.msra.mxu0 %v1511
  %1553 = vmatprep.subr.mxu0 0.0
  %1554 = vmatpush1.msra.mxu0 %v1510
  %1555 = vmatprep.subr.mxu0 0.0
  %1556 = vmatpush1.msra.mxu0 %v1509
  %1557 = vmatprep.subr.mxu0 0.0
  %1558 = vmatpush2.msra.mxu0 0.0
  %1559 = vmatprep.subr.mxu0 0.0
  %1560 = vmatpush2.msra.mxu0 0.0
  %1561 = vmatprep.subr.mxu0 0.0
  %1562 = vmatpush2.msra.mxu0 0.0
  %1563 = vmatprep.subr.mxu0 0.0
  %1564 = vmatpush2.msra.mxu0 0.0
  %1565 = vmatprep.subr.mxu0 0.0
  %1566 = vmatpush2.msra.mxu0 0.0
  %1567 = vmatprep.subr.mxu0 0.0
  %1568 = vmatpush2.msra.mxu0 0.0
  %1569 = vmatprep.subr.mxu0 0.0
  %1570 = vmatpush2.msra.mxu0 0.0
  %1571 = vmatprep.subr.mxu0 0.0
  %1572 = vmatpush2.msra.mxu0 0.0
  %1573 = vmatprep.subr.mxu0 0.0
  %1574 = vmatpush2.msra.mxu0 0.0
  %1575 = vmatprep.subr.mxu0 0.0
  %1576 = vmatpush2.msra.mxu0 0.0
  %1577 = vmatprep.subr.mxu0 0.0
  %1578 = vmatpush2.msra.mxu0 0.0
  %1579 = vmatprep.subr.mxu0 0.0
  %1580 = vmatpush2.msra.mxu0 0.0
  %1581 = vmatprep.subr.mxu0 0.0
  %1582 = vmatpush2.msra.mxu0 0.0
  %1583 = vmatprep.subr.mxu0 0.0
  %1584 = vmatpush2.msra.mxu0 0.0
  %1585 = vmatprep.subr.mxu0 0.0
  %1586 = vmatpush2.msra.mxu0 0.0
  %1587 = vmatprep.subr.mxu0 0.0
  %1588 = vmatpush2.msra.mxu0 0.0
  %1589 = vmatprep.mubr.f32.mxu0 0.0
  %1590 = vmatmul.mubr.f32.gmra.mxu0 %v1490
  %v1591 = vpop.f32.mrf.mxu0
  %v1592 = vadd.f32 0.0, %v1591
  %v1593 = vpop.f32.mrf.mxu0
  %1594 = vmatprep.mubr.f32.mxu0 0.0
  %1595 = vmatmul.mubr.f32.gmra.mxu0 %v1495
  %v1596 = vpop.f32.mrf.mxu0
  %v1597 = vadd.f32 0.0, %v1596
  %v1598 = vpop.f32.mrf.mxu0
  %1599 = vmatprep.mubr.f32.mxu0 0.0
  %1600 = vmatmul.mubr.f32.gmra.mxu0 %v1500
  %v1601 = vpop.f32.mrf.mxu0
  %v1602 = vadd.f32 0.0, %v1601
  %v1603 = vpop.f32.mrf.mxu0
  %1604 = vmatprep.mubr.f32.mxu0 0.0
  %1605 = vmatmul.mubr.f32.gmra.mxu0 %v1505
  %v1606 = vpop.f32.mrf.mxu0
  %v1607 = vadd.f32 0.0, %v1606
  %v1608 = vpop.f32.mrf.mxu0
  %1609 = vdwg.mxu0
  %v1610 = vadd.f32 %v1419, %v1592
  %v1611 = vadd.f32 %v1420, %v1597
  %v1612 = vadd.f32 %v1421, %v1602
  %v1613 = vadd.f32 %v1422, %v1607
  %v1614 = vmax.f32 %v1610, 0.0
  %v1615 = vmax.f32 %v1611, 0.0
  %v1616 = vmax.f32 %v1612, 0.0
  %v1617 = vmax.f32 %v1613, 0.0
  %1618 = vst [vmem:[%s6] sm:$0xff] %v1614
  %1619 = vst [vmem:[%s6 + $0x8] sm:$0xff] %v1615
  %1620 = vst [vmem:[%s6 + $0x10] sm:$0xff] %v1616
  %1621 = vst [vmem:[%s6 + $0x18] sm:$0xff] %v1617
  // Predicated region
  $region26: #{phi1_forward.1} parent=0 // pred_check
    _
  $region27: #{phi1_forward.1} parent=0 // pred_check_branch
    %1623 = sbr.rel (0) target = $region29
  $region28: #{phi1_forward.1} parent=0 // pred_region
    _
  $region29: #{phi1_forward.1} parent=0 // pred_fallthru
    _
  // Predicated region
  $region30: #{phi1_forward.1} parent=0 // pred_check
    _
  $region31: #{phi1_forward.1} parent=0 // pred_check_branch
    %1625 = sbr.rel (0) target = $region33
  $region32: #{phi1_forward.1} parent=0 // pred_region
    _
  $region33: #{phi1_forward.1} parent=0 // pred_fallthru
    _

</llo_original>
